<compile_context>
chip_gen: v5e
topology: v5e:2x2
jax: 0.10.0
libtpu: 0.0.40
codegen_flags: <defaults>
</compile_context>

<pallas_src>
import functools

import jax
import jax.numpy as jnp
from jax.experimental import pallas as pl
from jax.experimental.pallas import tpu as pltpu  # noqa: F401

EPS = 1e-05


def _bn_conv1x1_kernel(x_ref, gamma_ref, beta_ref, w_ref, o_ref, *, inv_count):
    # x_ref:     [Cp, Mp]   (channels x flattened spatial, zero padded)
    # gamma/beta:[1,  Cp]   (zero padded)
    # w_ref:     [Cout, Cp] (zero padded along Cp)
    # o_ref:     [Cout, Mp]
    x = x_ref[...]
    w = w_ref[...]
    cp = x.shape[0]

    # --- BatchNorm statistics (training mode, biased variance) ---------------
    # One-pass sums: padded rows/columns are zero so they add nothing; divide
    # by the TRUE element count (inv_count = 1/M), not the padded lane count.
    s1 = jnp.sum(x, axis=-1)                     # [Cp]
    s2 = jnp.sum(x * x, axis=-1)                 # [Cp]
    mean = (s1 * inv_count).reshape(1, cp)       # [1, Cp]
    ex2 = (s2 * inv_count).reshape(1, cp)        # [1, Cp]
    var = ex2 - mean * mean                      # biased variance (E[x^2]-E[x]^2)
    inv = jax.lax.rsqrt(var + EPS)               # EUP rsqrt

    scale = inv * gamma_ref[...]                 # [1, Cp]
    shift = beta_ref[...] - mean * scale         # [1, Cp]

    # --- Fold BN affine into the conv weight ---------------------------------
    # o = W @ ((x - mean)*scale + beta) = (W*scale) @ x + W @ shift
    w_scaled = w * scale                                       # [Cout, Cp]
    bias = jnp.sum(w * shift, axis=-1, keepdims=True)          # [Cout, 1]

    o_ref[...] = (
        jnp.dot(w_scaled, x, preferred_element_type=jnp.float32) + bias
    ).astype(o_ref.dtype)


def bn_conv1x1(x_nchw, gamma, beta, conv_w):
    """x_nchw: [N, Cin, H, W]; gamma/beta: [Cin]; conv_w: [Cout, Cin, 1, 1]."""
    N, C, H, W = x_nchw.shape
    Cout = conv_w.shape[0]
    M = N * H * W

    Cp = pl.cdiv(C, 128) * 128   # 112 -> 128 (lane-dense contraction dim)
    Mp = pl.cdiv(M, 128) * 128   # 196 -> 256 (lane-dense output dim)

    # NCHW -> [Cin, N*H*W]; for N == 1 the transpose is free (size-1 axis).
    x_cm = jnp.transpose(x_nchw, (1, 0, 2, 3)).reshape(C, M)
    x_p = jnp.pad(x_cm, ((0, Cp - C), (0, Mp - M)))

    w_p = jnp.pad(conv_w.reshape(Cout, C), ((0, 0), (0, Cp - C)))
    g_p = jnp.pad(gamma.reshape(1, C), ((0, 0), (0, Cp - C)))
    b_p = jnp.pad(beta.reshape(1, C), ((0, 0), (0, Cp - C)))

    kernel = functools.partial(_bn_conv1x1_kernel, inv_count=1.0 / M)

    # Whole problem is ~1.2 MiB of VMEM -> single grid point, no tiling.
    out_p = pl.pallas_call(
        kernel,
        out_shape=jax.ShapeDtypeStruct((Cout, Mp), x_nchw.dtype),
        in_specs=[
            pl.BlockSpec((Cp, Mp), lambda: (0, 0)),
            pl.BlockSpec((1, Cp), lambda: (0, 0)),
            pl.BlockSpec((1, Cp), lambda: (0, 0)),
            pl.BlockSpec((Cout, Cp), lambda: (0, 0)),
        ],
        out_specs=pl.BlockSpec((Cout, Mp), lambda: (0, 0)),
        cost_estimate=pl.CostEstimate(
            flops=2 * M * C * Cout,
            transcendentals=C,
            bytes_accessed=4 * (Cp * Mp + 2 * Cp + Cout * Cp + Cout * Mp),
        ),
    )(x_p, g_p, b_p, w_p)

    # Drop lane padding and reshape back to NCHW (free transpose for N == 1).
    out = out_p[:, :M].reshape(Cout, N, H, W)
    return jnp.transpose(out, (1, 0, 2, 3))


def _reference(x_nchw, gamma, beta, conv_w):
    """Pure-JAX reference of training-mode BN + 1x1 conv."""
    mean = jnp.mean(x_nchw, axis=(0, 2, 3), keepdims=True)
    var = jnp.mean(jnp.square(x_nchw - mean), axis=(0, 2, 3), keepdims=True)
    xn = (x_nchw - mean) * jax.lax.rsqrt(var + EPS)
    xn = xn * gamma.reshape(1, -1, 1, 1) + beta.reshape(1, -1, 1, 1)
    return jnp.einsum("oc,nchw->nohw", conv_w.reshape(conv_w.shape[0], -1), xn)


if __name__ == "__main__":
    key = jax.random.PRNGKey(0)
    kx, kg, kb, kw = jax.random.split(key, 4)

    # Shapes from the PyTorch module: x [1, 112, 14, 14] -> out [1, 672, 14, 14].
    N, Cin, H, W, Cout = 1, 112, 14, 14, 672

    x = jax.random.normal(kx, (N, Cin, H, W), dtype=jnp.float32)
    gamma = 1.0 + 0.1 * jax.random.normal(kg, (Cin,), dtype=jnp.float32)
    beta = 0.1 * jax.random.normal(kb, (Cin,), dtype=jnp.float32)
    bound = 1.0 / jnp.sqrt(jnp.float32(Cin))
    conv_w = jax.random.uniform(
        kw, (Cout, Cin, 1, 1), minval=-bound, maxval=bound, dtype=jnp.float32
    )

    out = bn_conv1x1(x, gamma, beta, conv_w)
    out = jax.block_until_ready(out)

    assert out.shape == (N, Cout, H, W), out.shape

    ref = jax.block_until_ready(_reference(x, gamma, beta, conv_w))
    assert jnp.allclose(out, ref, atol=1e-3, rtol=1e-3), float(
        jnp.max(jnp.abs(out - ref))
    )

    # TODO(synk): BatchNorm running_mean/running_var buffer updates (training
    # side effect only) are not modeled; forward output is identical.
    print("KERNEL_OK")
</pallas_src>

<mosaic_0001>
module attributes {stable_mosaic.version = 11 : i64} {
  func.func @_bn_conv1x1_kernel(%arg0: memref<128x256xf32, #tpu.memory_space<vmem>>, %arg1: memref<1x128xf32, #tpu.memory_space<vmem>>, %arg2: memref<1x128xf32, #tpu.memory_space<vmem>>, %arg3: memref<672x128xf32, #tpu.memory_space<vmem>>, %arg4: memref<672x256xf32, #tpu.memory_space<vmem>>) attributes {dimension_semantics = [], scalar_prefetch = 0 : i64, scratch_operands = 0 : i64, tpu.core_type = #tpu.core_type<tc>} {
    %c0 = arith.constant 0 : index
    %c0_0 = arith.constant 0 : index
    %0 = vector.load %arg0[%c0, %c0_0] : memref<128x256xf32, #tpu.memory_space<vmem>>, vector<128x256xf32>
    %c0_1 = arith.constant 0 : index
    %c0_2 = arith.constant 0 : index
    %1 = vector.load %arg3[%c0_1, %c0_2] : memref<672x128xf32, #tpu.memory_space<vmem>>, vector<672x128xf32>
    %cst = arith.constant dense<0.000000e+00> : vector<128xf32>
    %2 = vector.multi_reduction <add>, %0, %cst [1] : vector<128x256xf32> to vector<128xf32>
    %3 = arith.mulf %0, %0 : vector<128x256xf32>
    %cst_3 = arith.constant dense<0.000000e+00> : vector<128xf32>
    %4 = vector.multi_reduction <add>, %3, %cst_3 [1] : vector<128x256xf32> to vector<128xf32>
    %cst_4 = arith.constant 0.00510204071 : f32
    %5 = vector.broadcast %cst_4 : f32 to vector<128xf32>
    %6 = arith.mulf %2, %5 : vector<128xf32>
    %7 = vector.shape_cast %6 : vector<128xf32> to vector<1x128xf32>
    %cst_5 = arith.constant 0.00510204071 : f32
    %8 = vector.broadcast %cst_5 : f32 to vector<128xf32>
    %9 = arith.mulf %4, %8 : vector<128xf32>
    %10 = vector.shape_cast %9 : vector<128xf32> to vector<1x128xf32>
    %11 = arith.mulf %7, %7 : vector<1x128xf32>
    %12 = arith.subf %10, %11 : vector<1x128xf32>
    %cst_6 = arith.constant 9.99999974E-6 : f32
    %13 = vector.broadcast %cst_6 : f32 to vector<1x128xf32>
    %14 = arith.addf %12, %13 : vector<1x128xf32>
    %15 = math.rsqrt %14 : vector<1x128xf32>
    %c0_7 = arith.constant 0 : index
    %c0_8 = arith.constant 0 : index
    %16 = vector.load %arg1[%c0_7, %c0_8] : memref<1x128xf32, #tpu.memory_space<vmem>>, vector<1x128xf32>
    %17 = arith.mulf %15, %16 : vector<1x128xf32>
    %c0_9 = arith.constant 0 : index
    %c0_10 = arith.constant 0 : index
    %18 = vector.load %arg2[%c0_9, %c0_10] : memref<1x128xf32, #tpu.memory_space<vmem>>, vector<1x128xf32>
    %19 = arith.mulf %7, %17 : vector<1x128xf32>
    %20 = arith.subf %18, %19 : vector<1x128xf32>
    %21 = vector.broadcast %17 : vector<1x128xf32> to vector<672x128xf32>
    %22 = arith.mulf %1, %21 : vector<672x128xf32>
    %23 = vector.broadcast %20 : vector<1x128xf32> to vector<672x128xf32>
    %24 = arith.mulf %1, %23 : vector<672x128xf32>
    %cst_11 = arith.constant dense<0.000000e+00> : vector<672xf32>
    %25 = vector.multi_reduction <add>, %24, %cst_11 [1] : vector<672x128xf32> to vector<672xf32>
    %26 = vector.shape_cast %25 : vector<672xf32> to vector<672x1xf32>
    %cst_12 = arith.constant dense<0.000000e+00> : vector<672x256xf32>
    %27 = tpu.matmul %22, %0, %cst_12 {dimension_numbers = #tpu.dot_dimension_numbers<[1], [0], [0], [1], [0, 0, 1, 1], [], []>} : vector<672x128xf32>, vector<128x256xf32>, vector<672x256xf32> -> vector<672x256xf32>
    %28 = vector.broadcast %26 : vector<672x1xf32> to vector<672x256xf32>
    %29 = arith.addf %27, %28 : vector<672x256xf32>
    %c0_13 = arith.constant 0 : index
    %c0_14 = arith.constant 0 : index
    %30 = vector.load %arg4[%c0_13, %c0_14] : memref<672x256xf32, #tpu.memory_space<vmem>>, vector<672x256xf32>
    tpu.vector_store %arg4[%c0_13, %c0_14], %29 {strides = array<i32>} : memref<672x256xf32, #tpu.memory_space<vmem>>, vector<672x256xf32>,
    return
  }
}

</mosaic_0001>

<llo_original>
// kernel: tpu_custom_call.1
$region0: #{tpu_custom_call.1}
  #allocation0 [shape = 'u32[]', space=smem, size = 0x4, offset = 0x4, fixed_abs, tag = 'smem constant byte address 0x4 - core index']
  #allocation1 [shape = 'u32[72,128]{1,0:T(1,128)}', space=vmem, size = 0x9000, scoped, tag = 'internal scratch']
  %s0 = inlined_call_operand.hbm [shape: f32[128,256], index: 0, kind: input, shape index: {}]
  %s1 = inlined_call_operand.hbm [shape: f32[1,128], index: 1, kind: input, shape index: {}]
  %s2 = inlined_call_operand.vmem [shape: f32[1,128], index: 2, kind: input, shape index: {}]
  %s3 = inlined_call_operand.hbm [shape: f32[672,128], index: 3, kind: input, shape index: {}]
  %s4 = inlined_call_operand.hbm [shape: f32[672,256], index: 4, kind: output, shape index: {}]
  %s5 = sld [smem:[#allocation0]]
  $region38: #{tpu_custom_call.1} parent=0
    _
  %s7 = ssub.s32 1, %s5
  %s8 = scalar_select 0, %s7, %s5
  $region1: #{tpu_custom_call.1} parent=0
    #allocation2 [shape = 'u8[131072]{0}', space=vmem, size = 0x20000, scoped, tag = 'input window, operand 0, single buffered']
    #allocation3 [shape = 's32[1]{0}', space=sflag, size = 0x4, scoped, tag = 'scoped memory for tpu_custom_call.1']
    #allocation4 [shape = 's32[1]{0}', space=sflag, size = 0x4, scoped, tag = 'scoped memory for tpu_custom_call.1']
    #allocation5 [shape = 'u8[512]{0}', space=vmem, size = 0x400, scoped, tag = 'input window, operand 1, single buffered']
    #allocation6 [shape = 's32[1]{0}', space=sflag, size = 0x4, scoped, tag = 'scoped memory for tpu_custom_call.1']
    #allocation7 [shape = 'u8[344064]{0}', space=vmem, size = 0x54000, scoped, tag = 'input window, operand 3, single buffered']
    #allocation8 [shape = 'u8[688128]{0}', space=vmem, size = 0xa8000, scoped, tag = 'output window, operand 0, single buffered']
    %9 = vsyncpa [#allocation3], 0
    %10 = vsyncpa [#allocation6], 0
    %11 = vsyncpa [#allocation4], 0
    // Predicated region
    $region2: #{tpu_custom_call.1} parent=1 // pred_check
      _
    $region3: #{tpu_custom_call.1} parent=1 // pred_check_branch
      %13 = sbr.rel (0) target = $region5
    $region4: #{tpu_custom_call.1} parent=1 // pred_region
      %15 = vsyncadd [#allocation3], 0
      %s16 = sshll.u32 %s0, 4
      %s17 = int_to_ptr.hbm [resolvable:$true] %s16
      %s18 = sshll.u32 [#allocation2], 4
      %s19 = int_to_ptr.vmem [resolvable:$true] %s18
      %24 = dma.hbm_to_vmem [thread:$0]  %s17, 4096, %s19, [#allocation3], 256, 256, 16
    $region5: #{tpu_custom_call.1} parent=1 // pred_fallthru
      _
    // Predicated region
    $region6: #{tpu_custom_call.1} parent=1 // pred_check
      _
    $region7: #{tpu_custom_call.1} parent=1 // pred_check_branch
      %26 = sbr.rel (0) target = $region9
    $region8: #{tpu_custom_call.1} parent=1 // pred_region
      %28 = vsyncadd [#allocation6], 0
      %s30 = sshll.u32 %s1, 4
      %s31 = int_to_ptr.hbm [resolvable:$true] %s30
      %s32 = sshll.u32 [#allocation5], 4
      %s33 = int_to_ptr.vmem [resolvable:$true] %s32
      %35 = dma.hbm_to_vmem [thread:$0]  %s31, 16, %s33, [#allocation6]
    $region9: #{tpu_custom_call.1} parent=1 // pred_fallthru
      _
    // Predicated region
    $region10: #{tpu_custom_call.1} parent=1 // pred_check
      _
    $region11: #{tpu_custom_call.1} parent=1 // pred_check_branch
      %37 = sbr.rel (0) target = $region13
    $region12: #{tpu_custom_call.1} parent=1 // pred_region
      _
    $region13: #{tpu_custom_call.1} parent=1 // pred_fallthru
      _
    // Predicated region
    $region14: #{tpu_custom_call.1} parent=1 // pred_check
      _
    $region15: #{tpu_custom_call.1} parent=1 // pred_check_branch
      %39 = sbr.rel (0) target = $region17
    $region16: #{tpu_custom_call.1} parent=1 // pred_region
      %41 = vsyncadd [#allocation6], 0
      %s42 = sshll.u32 %s3, 4
      %s43 = int_to_ptr.hbm [resolvable:$true] %s42
      %s44 = sshll.u32 [#allocation7], 4
      %s45 = int_to_ptr.vmem [resolvable:$true] %s44
      %50 = dma.hbm_to_vmem [thread:$0]  %s43, 10752, %s45, [#allocation6], 128, 128, 8
    $region17: #{tpu_custom_call.1} parent=1 // pred_fallthru
      _
    // Predicated region
    $region18: #{tpu_custom_call.1} parent=1 // pred_check
      _
    $region19: #{tpu_custom_call.1} parent=1 // pred_check_branch
      %52 = sbr.rel (0) target = $region21
    $region20: #{tpu_custom_call.1} parent=1 // pred_region
      %54 = dma.done [#allocation3], 4096
    $region21: #{tpu_custom_call.1} parent=1 // pred_fallthru
      _
    // Predicated region
    $region22: #{tpu_custom_call.1} parent=1 // pred_check
      _
    $region23: #{tpu_custom_call.1} parent=1 // pred_check_branch
      %56 = sbr.rel (0) target = $region25
    $region24: #{tpu_custom_call.1} parent=1 // pred_region
      %58 = dma.done [#allocation6], 16
    $region25: #{tpu_custom_call.1} parent=1 // pred_fallthru
      _
    // Predicated region
    $region26: #{tpu_custom_call.1} parent=1 // pred_check
      _
    $region27: #{tpu_custom_call.1} parent=1 // pred_check_branch
      %60 = sbr.rel (0) target = $region29
    $region28: #{tpu_custom_call.1} parent=1 // pred_region
      %62 = dma.done [#allocation6], 10752
    $region29: #{tpu_custom_call.1} parent=1 // pred_fallthru
      _
    %v63 = vld [vmem:[#allocation2] sm:$0xff]
    %v64 = vld [vmem:[#allocation2 + $0x8] sm:$0xff]
    %v65 = vld [vmem:[#allocation2 + $0x10] sm:$0xff]
    %v66 = vld [vmem:[#allocation2 + $0x18] sm:$0xff]
    %v67 = vld [vmem:[#allocation2 + $0x20] sm:$0xff]
    %v68 = vld [vmem:[#allocation2 + $0x28] sm:$0xff]
    %v69 = vld [vmem:[#allocation2 + $0x30] sm:$0xff]
    %v70 = vld [vmem:[#allocation2 + $0x38] sm:$0xff]
    %v71 = vld [vmem:[#allocation2 + $0x40] sm:$0xff]
    %v72 = vld [vmem:[#allocation2 + $0x48] sm:$0xff]
    %v73 = vld [vmem:[#allocation2 + $0x50] sm:$0xff]
    %v74 = vld [vmem:[#allocation2 + $0x58] sm:$0xff]
    %v75 = vld [vmem:[#allocation2 + $0x60] sm:$0xff]
    %v76 = vld [vmem:[#allocation2 + $0x68] sm:$0xff]
    %v77 = vld [vmem:[#allocation2 + $0x70] sm:$0xff]
    %v78 = vld [vmem:[#allocation2 + $0x78] sm:$0xff]
    %v79 = vld [vmem:[#allocation2 + $0x80] sm:$0xff]
    %v80 = vld [vmem:[#allocation2 + $0x88] sm:$0xff]
    %v81 = vld [vmem:[#allocation2 + $0x90] sm:$0xff]
    %v82 = vld [vmem:[#allocation2 + $0x98] sm:$0xff]
    %v83 = vld [vmem:[#allocation2 + $0xa0] sm:$0xff]
    %v84 = vld [vmem:[#allocation2 + $0xa8] sm:$0xff]
    %v85 = vld [vmem:[#allocation2 + $0xb0] sm:$0xff]
    %v86 = vld [vmem:[#allocation2 + $0xb8] sm:$0xff]
    %v87 = vld [vmem:[#allocation2 + $0xc0] sm:$0xff]
    %v88 = vld [vmem:[#allocation2 + $0xc8] sm:$0xff]
    %v89 = vld [vmem:[#allocation2 + $0xd0] sm:$0xff]
    %v90 = vld [vmem:[#allocation2 + $0xd8] sm:$0xff]
    %v91 = vld [vmem:[#allocation2 + $0xe0] sm:$0xff]
    %v92 = vld [vmem:[#allocation2 + $0xe8] sm:$0xff]
    %v93 = vld [vmem:[#allocation2 + $0xf0] sm:$0xff]
    %v94 = vld [vmem:[#allocation2 + $0xf8] sm:$0xff]
    %v95 = vld [vmem:[#allocation7] sm:$0xff]
    %v96 = vld [vmem:[#allocation7 + $0x8] sm:$0xff]
    %v97 = vld [vmem:[#allocation7 + $0x10] sm:$0xff]
    %v98 = vld [vmem:[#allocation7 + $0x18] sm:$0xff]
    %v99 = vld [vmem:[#allocation7 + $0x20] sm:$0xff]
    %v100 = vld [vmem:[#allocation7 + $0x28] sm:$0xff]
    %v101 = vld [vmem:[#allocation7 + $0x30] sm:$0xff]
    %v102 = vld [vmem:[#allocation7 + $0x38] sm:$0xff]
    %v103 = vld [vmem:[#allocation7 + $0x40] sm:$0xff]
    %v104 = vld [vmem:[#allocation7 + $0x48] sm:$0xff]
    %v105 = vld [vmem:[#allocation7 + $0x50] sm:$0xff]
    %v106 = vld [vmem:[#allocation7 + $0x58] sm:$0xff]
    %v107 = vld [vmem:[#allocation7 + $0x60] sm:$0xff]
    %v108 = vld [vmem:[#allocation7 + $0x68] sm:$0xff]
    %v109 = vld [vmem:[#allocation7 + $0x70] sm:$0xff]
    %v110 = vld [vmem:[#allocation7 + $0x78] sm:$0xff]
    %v111 = vld [vmem:[#allocation7 + $0x80] sm:$0xff]
    %v112 = vld [vmem:[#allocation7 + $0x88] sm:$0xff]
    %v113 = vld [vmem:[#allocation7 + $0x90] sm:$0xff]
    %v114 = vld [vmem:[#allocation7 + $0x98] sm:$0xff]
    %v115 = vld [vmem:[#allocation7 + $0xa0] sm:$0xff]
    %v116 = vld [vmem:[#allocation7 + $0xa8] sm:$0xff]
    %v117 = vld [vmem:[#allocation7 + $0xb0] sm:$0xff]
    %v118 = vld [vmem:[#allocation7 + $0xb8] sm:$0xff]
    %v119 = vld [vmem:[#allocation7 + $0xc0] sm:$0xff]
    %v120 = vld [vmem:[#allocation7 + $0xc8] sm:$0xff]
    %v121 = vld [vmem:[#allocation7 + $0xd0] sm:$0xff]
    %v122 = vld [vmem:[#allocation7 + $0xd8] sm:$0xff]
    %v123 = vld [vmem:[#allocation7 + $0xe0] sm:$0xff]
    %v124 = vld [vmem:[#allocation7 + $0xe8] sm:$0xff]
    %v125 = vld [vmem:[#allocation7 + $0xf0] sm:$0xff]
    %v126 = vld [vmem:[#allocation7 + $0xf8] sm:$0xff]
    %v127 = vld [vmem:[#allocation7 + $0x100] sm:$0xff]
    %v128 = vld [vmem:[#allocation7 + $0x108] sm:$0xff]
    %v129 = vld [vmem:[#allocation7 + $0x110] sm:$0xff]
    %v130 = vld [vmem:[#allocation7 + $0x118] sm:$0xff]
    %v131 = vld [vmem:[#allocation7 + $0x120] sm:$0xff]
    %v132 = vld [vmem:[#allocation7 + $0x128] sm:$0xff]
    %v133 = vld [vmem:[#allocation7 + $0x130] sm:$0xff]
    %v134 = vld [vmem:[#allocation7 + $0x138] sm:$0xff]
    %v135 = vld [vmem:[#allocation7 + $0x140] sm:$0xff]
    %v136 = vld [vmem:[#allocation7 + $0x148] sm:$0xff]
    %v137 = vld [vmem:[#allocation7 + $0x150] sm:$0xff]
    %v138 = vld [vmem:[#allocation7 + $0x158] sm:$0xff]
    %v139 = vld [vmem:[#allocation7 + $0x160] sm:$0xff]
    %v140 = vld [vmem:[#allocation7 + $0x168] sm:$0xff]
    %v141 = vld [vmem:[#allocation7 + $0x170] sm:$0xff]
    %v142 = vld [vmem:[#allocation7 + $0x178] sm:$0xff]
    %v143 = vld [vmem:[#allocation7 + $0x180] sm:$0xff]
    %v144 = vld [vmem:[#allocation7 + $0x188] sm:$0xff]
    %v145 = vld [vmem:[#allocation7 + $0x190] sm:$0xff]
    %v146 = vld [vmem:[#allocation7 + $0x198] sm:$0xff]
    %v147 = vld [vmem:[#allocation7 + $0x1a0] sm:$0xff]
    %v148 = vld [vmem:[#allocation7 + $0x1a8] sm:$0xff]
    %v149 = vld [vmem:[#allocation7 + $0x1b0] sm:$0xff]
    %v150 = vld [vmem:[#allocation7 + $0x1b8] sm:$0xff]
    %v151 = vld [vmem:[#allocation7 + $0x1c0] sm:$0xff]
    %v152 = vld [vmem:[#allocation7 + $0x1c8] sm:$0xff]
    %v153 = vld [vmem:[#allocation7 + $0x1d0] sm:$0xff]
    %v154 = vld [vmem:[#allocation7 + $0x1d8] sm:$0xff]
    %v155 = vld [vmem:[#allocation7 + $0x1e0] sm:$0xff]
    %v156 = vld [vmem:[#allocation7 + $0x1e8] sm:$0xff]
    %v157 = vld [vmem:[#allocation7 + $0x1f0] sm:$0xff]
    %v158 = vld [vmem:[#allocation7 + $0x1f8] sm:$0xff]
    %v159 = vld [vmem:[#allocation7 + $0x200] sm:$0xff]
    %v160 = vld [vmem:[#allocation7 + $0x208] sm:$0xff]
    %v161 = vld [vmem:[#allocation7 + $0x210] sm:$0xff]
    %v162 = vld [vmem:[#allocation7 + $0x218] sm:$0xff]
    %v163 = vld [vmem:[#allocation7 + $0x220] sm:$0xff]
    %v164 = vld [vmem:[#allocation7 + $0x228] sm:$0xff]
    %v165 = vld [vmem:[#allocation7 + $0x230] sm:$0xff]
    %v166 = vld [vmem:[#allocation7 + $0x238] sm:$0xff]
    %v167 = vld [vmem:[#allocation7 + $0x240] sm:$0xff]
    %v168 = vld [vmem:[#allocation7 + $0x248] sm:$0xff]
    %v169 = vld [vmem:[#allocation7 + $0x250] sm:$0xff]
    %v170 = vld [vmem:[#allocation7 + $0x258] sm:$0xff]
    %v171 = vld [vmem:[#allocation7 + $0x260] sm:$0xff]
    %v172 = vld [vmem:[#allocation7 + $0x268] sm:$0xff]
    %v173 = vld [vmem:[#allocation7 + $0x270] sm:$0xff]
    %v174 = vld [vmem:[#allocation7 + $0x278] sm:$0xff]
    %v175 = vld [vmem:[#allocation7 + $0x280] sm:$0xff]
    %v176 = vld [vmem:[#allocation7 + $0x288] sm:$0xff]
    %v177 = vld [vmem:[#allocation7 + $0x290] sm:$0xff]
    %v178 = vld [vmem:[#allocation7 + $0x298] sm:$0xff]
    %v179 = vadd.f32 %v63, %v64
    %180 = vadd.xlane.f32.xlu0 %v179
    %v181 = vpop.xlane.xlu0 %180
    %v182 = vadd.f32 %v65, %v66
    %183 = vadd.xlane.f32.xlu0 %v182
    %v184 = vpop.xlane.xlu0 %183
    %v185 = vadd.f32 %v67, %v68
    %186 = vadd.xlane.f32.xlu0 %v185
    %v187 = vpop.xlane.xlu0 %186
    %v188 = vadd.f32 %v69, %v70
    %189 = vadd.xlane.f32.xlu0 %v188
    %v190 = vpop.xlane.xlu0 %189
    %v191 = vadd.f32 %v71, %v72
    %192 = vadd.xlane.f32.xlu0 %v191
    %v193 = vpop.xlane.xlu0 %192
    %v194 = vadd.f32 %v73, %v74
    %195 = vadd.xlane.f32.xlu0 %v194
    %v196 = vpop.xlane.xlu0 %195
    %v197 = vadd.f32 %v75, %v76
    %198 = vadd.xlane.f32.xlu0 %v197
    %v199 = vpop.xlane.xlu0 %198
    %v200 = vadd.f32 %v77, %v78
    %201 = vadd.xlane.f32.xlu0 %v200
    %v202 = vpop.xlane.xlu0 %201
    %v203 = vadd.f32 %v79, %v80
    %204 = vadd.xlane.f32.xlu0 %v203
    %v205 = vpop.xlane.xlu0 %204
    %v206 = vadd.f32 %v81, %v82
    %207 = vadd.xlane.f32.xlu0 %v206
    %v208 = vpop.xlane.xlu0 %207
    %v209 = vadd.f32 %v83, %v84
    %210 = vadd.xlane.f32.xlu0 %v209
    %v211 = vpop.xlane.xlu0 %210
    %v212 = vadd.f32 %v85, %v86
    %213 = vadd.xlane.f32.xlu0 %v212
    %v214 = vpop.xlane.xlu0 %213
    %v215 = vadd.f32 %v87, %v88
    %216 = vadd.xlane.f32.xlu0 %v215
    %v217 = vpop.xlane.xlu0 %216
    %v218 = vadd.f32 %v89, %v90
    %219 = vadd.xlane.f32.xlu0 %v218
    %v220 = vpop.xlane.xlu0 %219
    %v221 = vadd.f32 %v91, %v92
    %222 = vadd.xlane.f32.xlu0 %v221
    %v223 = vpop.xlane.xlu0 %222
    %v224 = vadd.f32 %v93, %v94
    %225 = vadd.xlane.f32.xlu0 %v224
    %v226 = vpop.xlane.xlu0 %225
    %v227 = vmul.f32 %v63, %v63
    %v228 = vmul.f32 %v64, %v64
    %v229 = vmul.f32 %v65, %v65
    %v230 = vmul.f32 %v66, %v66
    %v231 = vmul.f32 %v67, %v67
    %v232 = vmul.f32 %v68, %v68
    %v233 = vmul.f32 %v69, %v69
    %v234 = vmul.f32 %v70, %v70
    %v235 = vmul.f32 %v71, %v71
    %v236 = vmul.f32 %v72, %v72
    %v237 = vmul.f32 %v73, %v73
    %v238 = vmul.f32 %v74, %v74
    %v239 = vmul.f32 %v75, %v75
    %v240 = vmul.f32 %v76, %v76
    %v241 = vmul.f32 %v77, %v77
    %v242 = vmul.f32 %v78, %v78
    %v243 = vmul.f32 %v79, %v79
    %v244 = vmul.f32 %v80, %v80
    %v245 = vmul.f32 %v81, %v81
    %v246 = vmul.f32 %v82, %v82
    %v247 = vmul.f32 %v83, %v83
    %v248 = vmul.f32 %v84, %v84
    %v249 = vmul.f32 %v85, %v85
    %v250 = vmul.f32 %v86, %v86
    %v251 = vmul.f32 %v87, %v87
    %v252 = vmul.f32 %v88, %v88
    %v253 = vmul.f32 %v89, %v89
    %v254 = vmul.f32 %v90, %v90
    %v255 = vmul.f32 %v91, %v91
    %v256 = vmul.f32 %v92, %v92
    %v257 = vmul.f32 %v93, %v93
    %v258 = vmul.f32 %v94, %v94
    %v259 = vadd.f32 %v227, %v228
    %260 = vadd.xlane.f32.xlu0 %v259
    %v261 = vpop.xlane.xlu0 %260
    %v262 = vadd.f32 %v229, %v230
    %263 = vadd.xlane.f32.xlu0 %v262
    %v264 = vpop.xlane.xlu0 %263
    %v265 = vadd.f32 %v231, %v232
    %266 = vadd.xlane.f32.xlu0 %v265
    %v267 = vpop.xlane.xlu0 %266
    %v268 = vadd.f32 %v233, %v234
    %269 = vadd.xlane.f32.xlu0 %v268
    %v270 = vpop.xlane.xlu0 %269
    %v271 = vadd.f32 %v235, %v236
    %272 = vadd.xlane.f32.xlu0 %v271
    %v273 = vpop.xlane.xlu0 %272
    %v274 = vadd.f32 %v237, %v238
    %275 = vadd.xlane.f32.xlu0 %v274
    %v276 = vpop.xlane.xlu0 %275
    %v277 = vadd.f32 %v239, %v240
    %278 = vadd.xlane.f32.xlu0 %v277
    %v279 = vpop.xlane.xlu0 %278
    %v280 = vadd.f32 %v241, %v242
    %281 = vadd.xlane.f32.xlu0 %v280
    %v282 = vpop.xlane.xlu0 %281
    %v283 = vadd.f32 %v243, %v244
    %284 = vadd.xlane.f32.xlu0 %v283
    %v285 = vpop.xlane.xlu0 %284
    %v286 = vadd.f32 %v245, %v246
    %287 = vadd.xlane.f32.xlu0 %v286
    %v288 = vpop.xlane.xlu0 %287
    %v289 = vadd.f32 %v247, %v248
    %290 = vadd.xlane.f32.xlu0 %v289
    %v291 = vpop.xlane.xlu0 %290
    %v292 = vadd.f32 %v249, %v250
    %293 = vadd.xlane.f32.xlu0 %v292
    %v294 = vpop.xlane.xlu0 %293
    %v295 = vadd.f32 %v251, %v252
    %296 = vadd.xlane.f32.xlu0 %v295
    %v297 = vpop.xlane.xlu0 %296
    %v298 = vadd.f32 %v253, %v254
    %299 = vadd.xlane.f32.xlu0 %v298
    %v300 = vpop.xlane.xlu0 %299
    %v301 = vadd.f32 %v255, %v256
    %302 = vadd.xlane.f32.xlu0 %v301
    %v303 = vpop.xlane.xlu0 %302
    %v304 = vadd.f32 %v257, %v258
    %305 = vadd.xlane.f32.xlu0 %v304
    %v306 = vpop.xlane.xlu0 %305
    %v307 = vmul.f32 %v181, 0.0051020407
    %v308 = vmul.f32 %v184, 0.0051020407
    %v309 = vmul.f32 %v187, 0.0051020407
    %v310 = vmul.f32 %v190, 0.0051020407
    %v311 = vmul.f32 %v193, 0.0051020407
    %v312 = vmul.f32 %v196, 0.0051020407
    %v313 = vmul.f32 %v199, 0.0051020407
    %v314 = vmul.f32 %v202, 0.0051020407
    %v315 = vmul.f32 %v205, 0.0051020407
    %v316 = vmul.f32 %v208, 0.0051020407
    %v317 = vmul.f32 %v211, 0.0051020407
    %v318 = vmul.f32 %v214, 0.0051020407
    %v319 = vmul.f32 %v217, 0.0051020407
    %v320 = vmul.f32 %v220, 0.0051020407
    %v321 = vmul.f32 %v223, 0.0051020407
    %v322 = vmul.f32 %v226, 0.0051020407
    %v323 = vmul.f32 %v261, 0.0051020407
    %v324 = vmul.f32 %v264, 0.0051020407
    %v325 = vmul.f32 %v267, 0.0051020407
    %v326 = vmul.f32 %v270, 0.0051020407
    %v327 = vmul.f32 %v273, 0.0051020407
    %v328 = vmul.f32 %v276, 0.0051020407
    %v329 = vmul.f32 %v279, 0.0051020407
    %v330 = vmul.f32 %v282, 0.0051020407
    %v331 = vmul.f32 %v285, 0.0051020407
    %v332 = vmul.f32 %v288, 0.0051020407
    %v333 = vmul.f32 %v291, 0.0051020407
    %v334 = vmul.f32 %v294, 0.0051020407
    %v335 = vmul.f32 %v297, 0.0051020407
    %v336 = vmul.f32 %v300, 0.0051020407
    %v337 = vmul.f32 %v303, 0.0051020407
    %v338 = vmul.f32 %v306, 0.0051020407
    %v339 = vmul.f32 %v307, %v307
    %v340 = vmul.f32 %v308, %v308
    %v341 = vmul.f32 %v309, %v309
    %v342 = vmul.f32 %v310, %v310
    %v343 = vmul.f32 %v311, %v311
    %v344 = vmul.f32 %v312, %v312
    %v345 = vmul.f32 %v313, %v313
    %v346 = vmul.f32 %v314, %v314
    %v347 = vmul.f32 %v315, %v315
    %v348 = vmul.f32 %v316, %v316
    %v349 = vmul.f32 %v317, %v317
    %v350 = vmul.f32 %v318, %v318
    %v351 = vmul.f32 %v319, %v319
    %v352 = vmul.f32 %v320, %v320
    %v353 = vmul.f32 %v321, %v321
    %v354 = vmul.f32 %v322, %v322
    %v355 = vsub.f32 %v323, %v339
    %v356 = vsub.f32 %v324, %v340
    %v357 = vsub.f32 %v325, %v341
    %v358 = vsub.f32 %v326, %v342
    %v359 = vsub.f32 %v327, %v343
    %v360 = vsub.f32 %v328, %v344
    %v361 = vsub.f32 %v329, %v345
    %v362 = vsub.f32 %v330, %v346
    %v363 = vsub.f32 %v331, %v347
    %v364 = vsub.f32 %v332, %v348
    %v365 = vsub.f32 %v333, %v349
    %v366 = vsub.f32 %v334, %v350
    %v367 = vsub.f32 %v335, %v351
    %v368 = vsub.f32 %v336, %v352
    %v369 = vsub.f32 %v337, %v353
    %v370 = vsub.f32 %v338, %v354
    %v371 = vadd.f32 %v355, 1e-05
    %v372 = vadd.f32 %v356, 1e-05
    %v373 = vadd.f32 %v357, 1e-05
    %v374 = vadd.f32 %v358, 1e-05
    %v375 = vadd.f32 %v359, 1e-05
    %v376 = vadd.f32 %v360, 1e-05
    %v377 = vadd.f32 %v361, 1e-05
    %v378 = vadd.f32 %v362, 1e-05
    %v379 = vadd.f32 %v363, 1e-05
    %v380 = vadd.f32 %v364, 1e-05
    %v381 = vadd.f32 %v365, 1e-05
    %v382 = vadd.f32 %v366, 1e-05
    %v383 = vadd.f32 %v367, 1e-05
    %v384 = vadd.f32 %v368, 1e-05
    %v385 = vadd.f32 %v369, 1e-05
    %v386 = vadd.f32 %v370, 1e-05
    %v387 = vrsqrt.pop %v371
    %v388 = vmul.f32 %v387, %v371
    %v389 = vmul.f32 %v388, %v387
    %v390 = vmul.f32 0.5, %v389
    %v391 = vsub.f32 1.5, %v390
    %v392 = vmul.f32 %v387, %v391
    %vm393 = vweird.f32 %v371
    %vm394 = vweird.f32 %v387
    %vm395 = vmor %vm393, %vm394
    %v396 = vsel %vm395, %v387, %v392
    %v397 = vrsqrt.pop %v372
    %v398 = vmul.f32 %v397, %v372
    %v399 = vmul.f32 %v398, %v397
    %v400 = vmul.f32 0.5, %v399
    %v401 = vsub.f32 1.5, %v400
    %v402 = vmul.f32 %v397, %v401
    %vm403 = vweird.f32 %v372
    %vm404 = vweird.f32 %v397
    %vm405 = vmor %vm403, %vm404
    %v406 = vsel %vm405, %v397, %v402
    %v407 = vrsqrt.pop %v373
    %v408 = vmul.f32 %v407, %v373
    %v409 = vmul.f32 %v408, %v407
    %v410 = vmul.f32 0.5, %v409
    %v411 = vsub.f32 1.5, %v410
    %v412 = vmul.f32 %v407, %v411
    %vm413 = vweird.f32 %v373
    %vm414 = vweird.f32 %v407
    %vm415 = vmor %vm413, %vm414
    %v416 = vsel %vm415, %v407, %v412
    %v417 = vrsqrt.pop %v374
    %v418 = vmul.f32 %v417, %v374
    %v419 = vmul.f32 %v418, %v417
    %v420 = vmul.f32 0.5, %v419
    %v421 = vsub.f32 1.5, %v420
    %v422 = vmul.f32 %v417, %v421
    %vm423 = vweird.f32 %v374
    %vm424 = vweird.f32 %v417
    %vm425 = vmor %vm423, %vm424
    %v426 = vsel %vm425, %v417, %v422
    %v427 = vrsqrt.pop %v375
    %v428 = vmul.f32 %v427, %v375
    %v429 = vmul.f32 %v428, %v427
    %v430 = vmul.f32 0.5, %v429
    %v431 = vsub.f32 1.5, %v430
    %v432 = vmul.f32 %v427, %v431
    %vm433 = vweird.f32 %v375
    %vm434 = vweird.f32 %v427
    %vm435 = vmor %vm433, %vm434
    %v436 = vsel %vm435, %v427, %v432
    %v437 = vrsqrt.pop %v376
    %v438 = vmul.f32 %v437, %v376
    %v439 = vmul.f32 %v438, %v437
    %v440 = vmul.f32 0.5, %v439
    %v441 = vsub.f32 1.5, %v440
    %v442 = vmul.f32 %v437, %v441
    %vm443 = vweird.f32 %v376
    %vm444 = vweird.f32 %v437
    %vm445 = vmor %vm443, %vm444
    %v446 = vsel %vm445, %v437, %v442
    %v447 = vrsqrt.pop %v377
    %v448 = vmul.f32 %v447, %v377
    %v449 = vmul.f32 %v448, %v447
    %v450 = vmul.f32 0.5, %v449
    %v451 = vsub.f32 1.5, %v450
    %v452 = vmul.f32 %v447, %v451
    %vm453 = vweird.f32 %v377
    %vm454 = vweird.f32 %v447
    %vm455 = vmor %vm453, %vm454
    %v456 = vsel %vm455, %v447, %v452
    %v457 = vrsqrt.pop %v378
    %v458 = vmul.f32 %v457, %v378
    %v459 = vmul.f32 %v458, %v457
    %v460 = vmul.f32 0.5, %v459
    %v461 = vsub.f32 1.5, %v460
    %v462 = vmul.f32 %v457, %v461
    %vm463 = vweird.f32 %v378
    %vm464 = vweird.f32 %v457
    %vm465 = vmor %vm463, %vm464
    %v466 = vsel %vm465, %v457, %v462
    %v467 = vrsqrt.pop %v379
    %v468 = vmul.f32 %v467, %v379
    %v469 = vmul.f32 %v468, %v467
    %v470 = vmul.f32 0.5, %v469
    %v471 = vsub.f32 1.5, %v470
    %v472 = vmul.f32 %v467, %v471
    %vm473 = vweird.f32 %v379
    %vm474 = vweird.f32 %v467
    %vm475 = vmor %vm473, %vm474
    %v476 = vsel %vm475, %v467, %v472
    %v477 = vrsqrt.pop %v380
    %v478 = vmul.f32 %v477, %v380
    %v479 = vmul.f32 %v478, %v477
    %v480 = vmul.f32 0.5, %v479
    %v481 = vsub.f32 1.5, %v480
    %v482 = vmul.f32 %v477, %v481
    %vm483 = vweird.f32 %v380
    %vm484 = vweird.f32 %v477
    %vm485 = vmor %vm483, %vm484
    %v486 = vsel %vm485, %v477, %v482
    %v487 = vrsqrt.pop %v381
    %v488 = vmul.f32 %v487, %v381
    %v489 = vmul.f32 %v488, %v487
    %v490 = vmul.f32 0.5, %v489
    %v491 = vsub.f32 1.5, %v490
    %v492 = vmul.f32 %v487, %v491
    %vm493 = vweird.f32 %v381
    %vm494 = vweird.f32 %v487
    %vm495 = vmor %vm493, %vm494
    %v496 = vsel %vm495, %v487, %v492
    %v497 = vrsqrt.pop %v382
    %v498 = vmul.f32 %v497, %v382
    %v499 = vmul.f32 %v498, %v497
    %v500 = vmul.f32 0.5, %v499
    %v501 = vsub.f32 1.5, %v500
    %v502 = vmul.f32 %v497, %v501
    %vm503 = vweird.f32 %v382
    %vm504 = vweird.f32 %v497
    %vm505 = vmor %vm503, %vm504
    %v506 = vsel %vm505, %v497, %v502
    %v507 = vrsqrt.pop %v383
    %v508 = vmul.f32 %v507, %v383
    %v509 = vmul.f32 %v508, %v507
    %v510 = vmul.f32 0.5, %v509
    %v511 = vsub.f32 1.5, %v510
    %v512 = vmul.f32 %v507, %v511
    %vm513 = vweird.f32 %v383
    %vm514 = vweird.f32 %v507
    %vm515 = vmor %vm513, %vm514
    %v516 = vsel %vm515, %v507, %v512
    %v517 = vrsqrt.pop %v384
    %v518 = vmul.f32 %v517, %v384
    %v519 = vmul.f32 %v518, %v517
    %v520 = vmul.f32 0.5, %v519
    %v521 = vsub.f32 1.5, %v520
    %v522 = vmul.f32 %v517, %v521
    %vm523 = vweird.f32 %v384
    %vm524 = vweird.f32 %v517
    %vm525 = vmor %vm523, %vm524
    %v526 = vsel %vm525, %v517, %v522
    %v527 = vrsqrt.pop %v385
    %v528 = vmul.f32 %v527, %v385
    %v529 = vmul.f32 %v528, %v527
    %v530 = vmul.f32 0.5, %v529
    %v531 = vsub.f32 1.5, %v530
    %v532 = vmul.f32 %v527, %v531
    %vm533 = vweird.f32 %v385
    %vm534 = vweird.f32 %v527
    %vm535 = vmor %vm533, %vm534
    %v536 = vsel %vm535, %v527, %v532
    %v537 = vrsqrt.pop %v386
    %v538 = vmul.f32 %v537, %v386
    %v539 = vmul.f32 %v538, %v537
    %v540 = vmul.f32 0.5, %v539
    %v541 = vsub.f32 1.5, %v540
    %v542 = vmul.f32 %v537, %v541
    %vm543 = vweird.f32 %v386
    %vm544 = vweird.f32 %v537
    %vm545 = vmor %vm543, %vm544
    %v546 = vsel %vm545, %v537, %v542
    %v547 = vld [vmem:[#allocation5] sm:$0x1]
    %v549 = vperm.slane %v547, 0
    %v550 = vlaneseq
    %v551 = vshrl.u32 %v550, 7
    %553 = vset.pattern.permute.xlu0 %v551
    %554 = vperm.xlu0 %553, %v549
    %v555 = vpop.permute.xlu0 %554
    %v556 = vlaneseq
    %v557 = vshrl.u32 %v556, 7
    %v558 = vadd.s32 %v557, 8
    %559 = vset.pattern.permute.xlu0 %v558
    %560 = vperm.xlu0 %559, %v549
    %v561 = vpop.permute.xlu0 %560
    %v562 = vlaneseq
    %v563 = vshrl.u32 %v562, 7
    %v564 = vadd.s32 %v563, 16
    %565 = vset.pattern.permute.xlu0 %v564
    %566 = vperm.xlu0 %565, %v549
    %v567 = vpop.permute.xlu0 %566
    %v568 = vlaneseq
    %v569 = vshrl.u32 %v568, 7
    %v570 = vadd.s32 %v569, 24
    %571 = vset.pattern.permute.xlu0 %v570
    %572 = vperm.xlu0 %571, %v549
    %v573 = vpop.permute.xlu0 %572
    %v574 = vlaneseq
    %v575 = vshrl.u32 %v574, 7
    %v576 = vadd.s32 %v575, 32
    %577 = vset.pattern.permute.xlu0 %v576
    %578 = vperm.xlu0 %577, %v549
    %v579 = vpop.permute.xlu0 %578
    %v580 = vlaneseq
    %v581 = vshrl.u32 %v580, 7
    %v582 = vadd.s32 %v581, 40
    %583 = vset.pattern.permute.xlu0 %v582
    %584 = vperm.xlu0 %583, %v549
    %v585 = vpop.permute.xlu0 %584
    %v586 = vlaneseq
    %v587 = vshrl.u32 %v586, 7
    %v588 = vadd.s32 %v587, 48
    %589 = vset.pattern.permute.xlu0 %v588
    %590 = vperm.xlu0 %589, %v549
    %v591 = vpop.permute.xlu0 %590
    %v592 = vlaneseq
    %v593 = vshrl.u32 %v592, 7
    %v594 = vadd.s32 %v593, 56
    %595 = vset.pattern.permute.xlu0 %v594
    %596 = vperm.xlu0 %595, %v549
    %v597 = vpop.permute.xlu0 %596
    %v598 = vlaneseq
    %v599 = vshrl.u32 %v598, 7
    %v600 = vadd.s32 %v599, 64
    %601 = vset.pattern.permute.xlu0 %v600
    %602 = vperm.xlu0 %601, %v549
    %v603 = vpop.permute.xlu0 %602
    %v604 = vlaneseq
    %v605 = vshrl.u32 %v604, 7
    %v606 = vadd.s32 %v605, 72
    %607 = vset.pattern.permute.xlu0 %v606
    %608 = vperm.xlu0 %607, %v549
    %v609 = vpop.permute.xlu0 %608
    %v610 = vlaneseq
    %v611 = vshrl.u32 %v610, 7
    %v612 = vadd.s32 %v611, 80
    %613 = vset.pattern.permute.xlu0 %v612
    %614 = vperm.xlu0 %613, %v549
    %v615 = vpop.permute.xlu0 %614
    %v616 = vlaneseq
    %v617 = vshrl.u32 %v616, 7
    %v618 = vadd.s32 %v617, 88
    %619 = vset.pattern.permute.xlu0 %v618
    %620 = vperm.xlu0 %619, %v549
    %v621 = vpop.permute.xlu0 %620
    %v622 = vlaneseq
    %v623 = vshrl.u32 %v622, 7
    %v624 = vadd.s32 %v623, 96
    %625 = vset.pattern.permute.xlu0 %v624
    %626 = vperm.xlu0 %625, %v549
    %v627 = vpop.permute.xlu0 %626
    %v628 = vlaneseq
    %v629 = vshrl.u32 %v628, 7
    %v630 = vadd.s32 %v629, 104
    %631 = vset.pattern.permute.xlu0 %v630
    %632 = vperm.xlu0 %631, %v549
    %v633 = vpop.permute.xlu0 %632
    %v634 = vlaneseq
    %v635 = vshrl.u32 %v634, 7
    %v636 = vadd.s32 %v635, 112
    %637 = vset.pattern.permute.xlu0 %v636
    %638 = vperm.xlu0 %637, %v549
    %v639 = vpop.permute.xlu0 %638
    %v640 = vlaneseq
    %v641 = vshrl.u32 %v640, 7
    %v642 = vadd.s32 %v641, 120
    %643 = vset.pattern.permute.xlu0 %v642
    %644 = vperm.xlu0 %643, %v549
    %v645 = vpop.permute.xlu0 %644
    %v662 = vmul.f32 %v396, %v555
    %v663 = vmul.f32 %v406, %v561
    %v664 = vmul.f32 %v416, %v567
    %v665 = vmul.f32 %v426, %v573
    %v666 = vmul.f32 %v436, %v579
    %v667 = vmul.f32 %v446, %v585
    %v668 = vmul.f32 %v456, %v591
    %v669 = vmul.f32 %v466, %v597
    %v670 = vmul.f32 %v476, %v603
    %v671 = vmul.f32 %v486, %v609
    %v672 = vmul.f32 %v496, %v615
    %v673 = vmul.f32 %v506, %v621
    %v674 = vmul.f32 %v516, %v627
    %v675 = vmul.f32 %v526, %v633
    %v676 = vmul.f32 %v536, %v639
    %v677 = vmul.f32 %v546, %v645
    %v678 = vld [vmem:[%s2] sm:$0x1]
    %v679 = vmul.f32 %v307, %v662
    %v680 = vmul.f32 %v308, %v663
    %v681 = vmul.f32 %v309, %v664
    %v682 = vmul.f32 %v310, %v665
    %v683 = vmul.f32 %v311, %v666
    %v684 = vmul.f32 %v312, %v667
    %v685 = vmul.f32 %v313, %v668
    %v686 = vmul.f32 %v314, %v669
    %v687 = vmul.f32 %v315, %v670
    %v688 = vmul.f32 %v316, %v671
    %v689 = vmul.f32 %v317, %v672
    %v690 = vmul.f32 %v318, %v673
    %v691 = vmul.f32 %v319, %v674
    %v692 = vmul.f32 %v320, %v675
    %v693 = vmul.f32 %v321, %v676
    %v694 = vmul.f32 %v322, %v677
    %v711 = vrot.slane %v679, 1
    %v712 = vrot.slane %v679, 2
    %v713 = vrot.slane %v679, 3
    %v714 = vrot.slane %v679, 4
    %v715 = vrot.slane %v679, 5
    %v716 = vrot.slane %v679, 6
    %v717 = vrot.slane %v679, 7
    %v718 = vrot.slane %v680, 1
    %v719 = vrot.slane %v680, 2
    %v720 = vrot.slane %v680, 3
    %v721 = vrot.slane %v680, 4
    %v722 = vrot.slane %v680, 5
    %v723 = vrot.slane %v680, 6
    %v724 = vrot.slane %v680, 7
    %v725 = vrot.slane %v681, 1
    %v726 = vrot.slane %v681, 2
    %v727 = vrot.slane %v681, 3
    %v728 = vrot.slane %v681, 4
    %v729 = vrot.slane %v681, 5
    %v730 = vrot.slane %v681, 6
    %v731 = vrot.slane %v681, 7
    %v732 = vrot.slane %v682, 1
    %v733 = vrot.slane %v682, 2
    %v734 = vrot.slane %v682, 3
    %v735 = vrot.slane %v682, 4
    %v736 = vrot.slane %v682, 5
    %v737 = vrot.slane %v682, 6
    %v738 = vrot.slane %v682, 7
    %v739 = vrot.slane %v683, 1
    %v740 = vrot.slane %v683, 2
    %v741 = vrot.slane %v683, 3
    %v742 = vrot.slane %v683, 4
    %v743 = vrot.slane %v683, 5
    %v744 = vrot.slane %v683, 6
    %v745 = vrot.slane %v683, 7
    %v746 = vrot.slane %v684, 1
    %v747 = vrot.slane %v684, 2
    %v748 = vrot.slane %v684, 3
    %v749 = vrot.slane %v684, 4
    %v750 = vrot.slane %v684, 5
    %v751 = vrot.slane %v684, 6
    %v752 = vrot.slane %v684, 7
    %v753 = vrot.slane %v685, 1
    %v754 = vrot.slane %v685, 2
    %v755 = vrot.slane %v685, 3
    %v756 = vrot.slane %v685, 4
    %v757 = vrot.slane %v685, 5
    %v758 = vrot.slane %v685, 6
    %v759 = vrot.slane %v685, 7
    %v760 = vrot.slane %v686, 1
    %v761 = vrot.slane %v686, 2
    %v762 = vrot.slane %v686, 3
    %v763 = vrot.slane %v686, 4
    %v764 = vrot.slane %v686, 5
    %v765 = vrot.slane %v686, 6
    %v766 = vrot.slane %v686, 7
    %v767 = vrot.slane %v687, 1
    %v768 = vrot.slane %v687, 2
    %v769 = vrot.slane %v687, 3
    %v770 = vrot.slane %v687, 4
    %v771 = vrot.slane %v687, 5
    %v772 = vrot.slane %v687, 6
    %v773 = vrot.slane %v687, 7
    %v774 = vrot.slane %v688, 1
    %v775 = vrot.slane %v688, 2
    %v776 = vrot.slane %v688, 3
    %v777 = vrot.slane %v688, 4
    %v778 = vrot.slane %v688, 5
    %v779 = vrot.slane %v688, 6
    %v780 = vrot.slane %v688, 7
    %v781 = vrot.slane %v689, 1
    %v782 = vrot.slane %v689, 2
    %v783 = vrot.slane %v689, 3
    %v784 = vrot.slane %v689, 4
    %v785 = vrot.slane %v689, 5
    %v786 = vrot.slane %v689, 6
    %v787 = vrot.slane %v689, 7
    %v788 = vrot.slane %v690, 1
    %v789 = vrot.slane %v690, 2
    %v790 = vrot.slane %v690, 3
    %v791 = vrot.slane %v690, 4
    %v792 = vrot.slane %v690, 5
    %v793 = vrot.slane %v690, 6
    %v794 = vrot.slane %v690, 7
    %v795 = vrot.slane %v691, 1
    %v796 = vrot.slane %v691, 2
    %v797 = vrot.slane %v691, 3
    %v798 = vrot.slane %v691, 4
    %v799 = vrot.slane %v691, 5
    %v800 = vrot.slane %v691, 6
    %v801 = vrot.slane %v691, 7
    %v802 = vrot.slane %v692, 1
    %v803 = vrot.slane %v692, 2
    %v804 = vrot.slane %v692, 3
    %v805 = vrot.slane %v692, 4
    %v806 = vrot.slane %v692, 5
    %v807 = vrot.slane %v692, 6
    %v808 = vrot.slane %v692, 7
    %v809 = vrot.slane %v693, 1
    %v810 = vrot.slane %v693, 2
    %v811 = vrot.slane %v693, 3
    %v812 = vrot.slane %v693, 4
    %v813 = vrot.slane %v693, 5
    %v814 = vrot.slane %v693, 6
    %v815 = vrot.slane %v693, 7
    %v816 = vrot.slane %v694, 1
    %v817 = vrot.slane %v694, 2
    %v818 = vrot.slane %v694, 3
    %v819 = vrot.slane %v694, 4
    %v820 = vrot.slane %v694, 5
    %v821 = vrot.slane %v694, 6
    %v822 = vrot.slane %v694, 7
    %823 = vst [vmem:[#allocation1] ss:$9 sm:$0xff] %v679
    %s824 = scalar_lea.vmem [#allocation1], 1
    %825 = vst [vmem:[%s824] ss:$9 sm:$0xff] %v711
    %s826 = scalar_lea.vmem [#allocation1], 2
    %827 = vst [vmem:[%s826] ss:$9 sm:$0xff] %v712
    %s828 = scalar_lea.vmem [#allocation1], 3
    %829 = vst [vmem:[%s828] ss:$9 sm:$0xff] %v713
    %s830 = scalar_lea.vmem [#allocation1], 4
    %831 = vst [vmem:[%s830] ss:$9 sm:$0xff] %v714
    %s832 = scalar_lea.vmem [#allocation1], 5
    %833 = vst [vmem:[%s832] ss:$9 sm:$0xff] %v715
    %s834 = scalar_lea.vmem [#allocation1], 6
    %835 = vst [vmem:[%s834] ss:$9 sm:$0xff] %v716
    %s836 = scalar_lea.vmem [#allocation1], 7
    %837 = vst [vmem:[%s836] ss:$9 sm:$0xff] %v717
    %v838 = vld [vmem:[#allocation1] sm:$0xff]
    %839 = vst [vmem:[#allocation1] ss:$9 sm:$0xff] %v680
    %840 = vst [vmem:[%s824] ss:$9 sm:$0xff] %v718
    %841 = vst [vmem:[%s826] ss:$9 sm:$0xff] %v719
    %842 = vst [vmem:[%s828] ss:$9 sm:$0xff] %v720
    %843 = vst [vmem:[%s830] ss:$9 sm:$0xff] %v721
    %844 = vst [vmem:[%s832] ss:$9 sm:$0xff] %v722
    %845 = vst [vmem:[%s834] ss:$9 sm:$0xff] %v723
    %846 = vst [vmem:[%s836] ss:$9 sm:$0xff] %v724
    %v847 = vld [vmem:[#allocation1] sm:$0xff]
    %848 = vst [vmem:[#allocation1] ss:$9 sm:$0xff] %v681
    %849 = vst [vmem:[%s824] ss:$9 sm:$0xff] %v725
    %850 = vst [vmem:[%s826] ss:$9 sm:$0xff] %v726
    %851 = vst [vmem:[%s828] ss:$9 sm:$0xff] %v727
    %852 = vst [vmem:[%s830] ss:$9 sm:$0xff] %v728
    %853 = vst [vmem:[%s832] ss:$9 sm:$0xff] %v729
    %854 = vst [vmem:[%s834] ss:$9 sm:$0xff] %v730
    %855 = vst [vmem:[%s836] ss:$9 sm:$0xff] %v731
    %v856 = vld [vmem:[#allocation1] sm:$0xff]
    %857 = vst [vmem:[#allocation1] ss:$9 sm:$0xff] %v682
    %858 = vst [vmem:[%s824] ss:$9 sm:$0xff] %v732
    %859 = vst [vmem:[%s826] ss:$9 sm:$0xff] %v733
    %860 = vst [vmem:[%s828] ss:$9 sm:$0xff] %v734
    %861 = vst [vmem:[%s830] ss:$9 sm:$0xff] %v735
    %862 = vst [vmem:[%s832] ss:$9 sm:$0xff] %v736
    %863 = vst [vmem:[%s834] ss:$9 sm:$0xff] %v737
    %864 = vst [vmem:[%s836] ss:$9 sm:$0xff] %v738
    %v865 = vld [vmem:[#allocation1] sm:$0xff]
    %866 = vst [vmem:[#allocation1] ss:$9 sm:$0xff] %v683
    %867 = vst [vmem:[%s824] ss:$9 sm:$0xff] %v739
    %868 = vst [vmem:[%s826] ss:$9 sm:$0xff] %v740
    %869 = vst [vmem:[%s828] ss:$9 sm:$0xff] %v741
    %870 = vst [vmem:[%s830] ss:$9 sm:$0xff] %v742
    %871 = vst [vmem:[%s832] ss:$9 sm:$0xff] %v743
    %872 = vst [vmem:[%s834] ss:$9 sm:$0xff] %v744
    %873 = vst [vmem:[%s836] ss:$9 sm:$0xff] %v745
    %v874 = vld [vmem:[#allocation1] sm:$0xff]
    %875 = vst [vmem:[#allocation1] ss:$9 sm:$0xff] %v684
    %876 = vst [vmem:[%s824] ss:$9 sm:$0xff] %v746
    %877 = vst [vmem:[%s826] ss:$9 sm:$0xff] %v747
    %878 = vst [vmem:[%s828] ss:$9 sm:$0xff] %v748
    %879 = vst [vmem:[%s830] ss:$9 sm:$0xff] %v749
    %880 = vst [vmem:[%s832] ss:$9 sm:$0xff] %v750
    %881 = vst [vmem:[%s834] ss:$9 sm:$0xff] %v751
    %882 = vst [vmem:[%s836] ss:$9 sm:$0xff] %v752
    %v883 = vld [vmem:[#allocation1] sm:$0xff]
    %884 = vst [vmem:[#allocation1] ss:$9 sm:$0xff] %v685
    %885 = vst [vmem:[%s824] ss:$9 sm:$0xff] %v753
    %886 = vst [vmem:[%s826] ss:$9 sm:$0xff] %v754
    %887 = vst [vmem:[%s828] ss:$9 sm:$0xff] %v755
    %888 = vst [vmem:[%s830] ss:$9 sm:$0xff] %v756
    %889 = vst [vmem:[%s832] ss:$9 sm:$0xff] %v757
    %890 = vst [vmem:[%s834] ss:$9 sm:$0xff] %v758
    %891 = vst [vmem:[%s836] ss:$9 sm:$0xff] %v759
    %v892 = vld [vmem:[#allocation1] sm:$0xff]
    %893 = vst [vmem:[#allocation1] ss:$9 sm:$0xff] %v686
    %894 = vst [vmem:[%s824] ss:$9 sm:$0xff] %v760
    %895 = vst [vmem:[%s826] ss:$9 sm:$0xff] %v761
    %896 = vst [vmem:[%s828] ss:$9 sm:$0xff] %v762
    %897 = vst [vmem:[%s830] ss:$9 sm:$0xff] %v763
    %898 = vst [vmem:[%s832] ss:$9 sm:$0xff] %v764
    %899 = vst [vmem:[%s834] ss:$9 sm:$0xff] %v765
    %900 = vst [vmem:[%s836] ss:$9 sm:$0xff] %v766
    %v901 = vld [vmem:[#allocation1] sm:$0xff]
    %902 = vst [vmem:[#allocation1] ss:$9 sm:$0xff] %v687
    %903 = vst [vmem:[%s824] ss:$9 sm:$0xff] %v767
    %904 = vst [vmem:[%s826] ss:$9 sm:$0xff] %v768
    %905 = vst [vmem:[%s828] ss:$9 sm:$0xff] %v769
    %906 = vst [vmem:[%s830] ss:$9 sm:$0xff] %v770
    %907 = vst [vmem:[%s832] ss:$9 sm:$0xff] %v771
    %908 = vst [vmem:[%s834] ss:$9 sm:$0xff] %v772
    %909 = vst [vmem:[%s836] ss:$9 sm:$0xff] %v773
    %v910 = vld [vmem:[#allocation1] sm:$0xff]
    %911 = vst [vmem:[#allocation1] ss:$9 sm:$0xff] %v688
    %912 = vst [vmem:[%s824] ss:$9 sm:$0xff] %v774
    %913 = vst [vmem:[%s826] ss:$9 sm:$0xff] %v775
    %914 = vst [vmem:[%s828] ss:$9 sm:$0xff] %v776
    %915 = vst [vmem:[%s830] ss:$9 sm:$0xff] %v777
    %916 = vst [vmem:[%s832] ss:$9 sm:$0xff] %v778
    %917 = vst [vmem:[%s834] ss:$9 sm:$0xff] %v779
    %918 = vst [vmem:[%s836] ss:$9 sm:$0xff] %v780
    %v919 = vld [vmem:[#allocation1] sm:$0xff]
    %920 = vst [vmem:[#allocation1] ss:$9 sm:$0xff] %v689
    %921 = vst [vmem:[%s824] ss:$9 sm:$0xff] %v781
    %922 = vst [vmem:[%s826] ss:$9 sm:$0xff] %v782
    %923 = vst [vmem:[%s828] ss:$9 sm:$0xff] %v783
    %924 = vst [vmem:[%s830] ss:$9 sm:$0xff] %v784
    %925 = vst [vmem:[%s832] ss:$9 sm:$0xff] %v785
    %926 = vst [vmem:[%s834] ss:$9 sm:$0xff] %v786
    %927 = vst [vmem:[%s836] ss:$9 sm:$0xff] %v787
    %v928 = vld [vmem:[#allocation1] sm:$0xff]
    %929 = vst [vmem:[#allocation1] ss:$9 sm:$0xff] %v690
    %930 = vst [vmem:[%s824] ss:$9 sm:$0xff] %v788
    %931 = vst [vmem:[%s826] ss:$9 sm:$0xff] %v789
    %932 = vst [vmem:[%s828] ss:$9 sm:$0xff] %v790
    %933 = vst [vmem:[%s830] ss:$9 sm:$0xff] %v791
    %934 = vst [vmem:[%s832] ss:$9 sm:$0xff] %v792
    %935 = vst [vmem:[%s834] ss:$9 sm:$0xff] %v793
    %936 = vst [vmem:[%s836] ss:$9 sm:$0xff] %v794
    %v937 = vld [vmem:[#allocation1] sm:$0xff]
    %938 = vst [vmem:[#allocation1] ss:$9 sm:$0xff] %v691
    %939 = vst [vmem:[%s824] ss:$9 sm:$0xff] %v795
    %940 = vst [vmem:[%s826] ss:$9 sm:$0xff] %v796
    %941 = vst [vmem:[%s828] ss:$9 sm:$0xff] %v797
    %942 = vst [vmem:[%s830] ss:$9 sm:$0xff] %v798
    %943 = vst [vmem:[%s832] ss:$9 sm:$0xff] %v799
    %944 = vst [vmem:[%s834] ss:$9 sm:$0xff] %v800
    %945 = vst [vmem:[%s836] ss:$9 sm:$0xff] %v801
    %v946 = vld [vmem:[#allocation1] sm:$0xff]
    %947 = vst [vmem:[#allocation1] ss:$9 sm:$0xff] %v692
    %948 = vst [vmem:[%s824] ss:$9 sm:$0xff] %v802
    %949 = vst [vmem:[%s826] ss:$9 sm:$0xff] %v803
    %950 = vst [vmem:[%s828] ss:$9 sm:$0xff] %v804
    %951 = vst [vmem:[%s830] ss:$9 sm:$0xff] %v805
    %952 = vst [vmem:[%s832] ss:$9 sm:$0xff] %v806
    %953 = vst [vmem:[%s834] ss:$9 sm:$0xff] %v807
    %954 = vst [vmem:[%s836] ss:$9 sm:$0xff] %v808
    %v955 = vld [vmem:[#allocation1] sm:$0xff]
    %956 = vst [vmem:[#allocation1] ss:$9 sm:$0xff] %v693
    %957 = vst [vmem:[%s824] ss:$9 sm:$0xff] %v809
    %958 = vst [vmem:[%s826] ss:$9 sm:$0xff] %v810
    %959 = vst [vmem:[%s828] ss:$9 sm:$0xff] %v811
    %960 = vst [vmem:[%s830] ss:$9 sm:$0xff] %v812
    %961 = vst [vmem:[%s832] ss:$9 sm:$0xff] %v813
    %962 = vst [vmem:[%s834] ss:$9 sm:$0xff] %v814
    %963 = vst [vmem:[%s836] ss:$9 sm:$0xff] %v815
    %v964 = vld [vmem:[#allocation1] sm:$0xff]
    %965 = vst [vmem:[#allocation1] ss:$9 sm:$0xff] %v694
    %966 = vst [vmem:[%s824] ss:$9 sm:$0xff] %v816
    %967 = vst [vmem:[%s826] ss:$9 sm:$0xff] %v817
    %968 = vst [vmem:[%s828] ss:$9 sm:$0xff] %v818
    %969 = vst [vmem:[%s830] ss:$9 sm:$0xff] %v819
    %970 = vst [vmem:[%s832] ss:$9 sm:$0xff] %v820
    %971 = vst [vmem:[%s834] ss:$9 sm:$0xff] %v821
    %972 = vst [vmem:[%s836] ss:$9 sm:$0xff] %v822
    %v973 = vld [vmem:[#allocation1] sm:$0xff]
    %974 = vset.pattern.permute.xlu0 0
    %975 = vperm.xlu0 %974, %v838
    %v976 = vpop.permute.xlu0 %975
    %977 = vset.pattern.permute.xlu0 0
    %978 = vperm.xlu0 %977, %v847
    %v979 = vpop.permute.xlu0 %978
    %980 = vset.pattern.permute.xlu0 0
    %981 = vperm.xlu0 %980, %v856
    %v982 = vpop.permute.xlu0 %981
    %983 = vset.pattern.permute.xlu0 0
    %984 = vperm.xlu0 %983, %v865
    %v985 = vpop.permute.xlu0 %984
    %986 = vset.pattern.permute.xlu0 0
    %987 = vperm.xlu0 %986, %v874
    %v988 = vpop.permute.xlu0 %987
    %989 = vset.pattern.permute.xlu0 0
    %990 = vperm.xlu0 %989, %v883
    %v991 = vpop.permute.xlu0 %990
    %992 = vset.pattern.permute.xlu0 0
    %993 = vperm.xlu0 %992, %v892
    %v994 = vpop.permute.xlu0 %993
    %995 = vset.pattern.permute.xlu0 0
    %996 = vperm.xlu0 %995, %v901
    %v997 = vpop.permute.xlu0 %996
    %998 = vset.pattern.permute.xlu0 0
    %999 = vperm.xlu0 %998, %v910
    %v1000 = vpop.permute.xlu0 %999
    %1001 = vset.pattern.permute.xlu0 0
    %1002 = vperm.xlu0 %1001, %v919
    %v1003 = vpop.permute.xlu0 %1002
    %1004 = vset.pattern.permute.xlu0 0
    %1005 = vperm.xlu0 %1004, %v928
    %v1006 = vpop.permute.xlu0 %1005
    %1007 = vset.pattern.permute.xlu0 0
    %1008 = vperm.xlu0 %1007, %v937
    %v1009 = vpop.permute.xlu0 %1008
    %1010 = vset.pattern.permute.xlu0 0
    %1011 = vperm.xlu0 %1010, %v946
    %v1012 = vpop.permute.xlu0 %1011
    %1013 = vset.pattern.permute.xlu0 0
    %1014 = vperm.xlu0 %1013, %v955
    %v1015 = vpop.permute.xlu0 %1014
    %1016 = vset.pattern.permute.xlu0 0
    %1017 = vperm.xlu0 %1016, %v964
    %v1018 = vpop.permute.xlu0 %1017
    %1019 = vset.pattern.permute.xlu0 0
    %1020 = vperm.xlu0 %1019, %v973
    %v1021 = vpop.permute.xlu0 %1020
    %v1022 = vlaneseq
    %v1023 = vand.u32 %v1022, 127
    %v1024 = vperm.slane %v976, %v1023
    %v1025 = vadd.s32 %v1023, 4294967288
    %v1026 = vperm.slane %v979, %v1025
    %vm1027 = vcmask 130112
    %v1028 = vsel %vm1027, %v1026, %v1024
    %v1029 = vadd.s32 %v1023, 4294967280
    %v1030 = vperm.slane %v982, %v1029
    %vm1031 = vcmask 195712
    %v1032 = vsel %vm1031, %v1030, %v1028
    %v1033 = vadd.s32 %v1023, 4294967272
    %v1034 = vperm.slane %v985, %v1033
    %vm1035 = vcmask 261312
    %v1036 = vsel %vm1035, %v1034, %v1032
    %v1037 = vadd.s32 %v1023, 4294967264
    %v1038 = vperm.slane %v988, %v1037
    %vm1039 = vcmask 326912
    %v1040 = vsel %vm1039, %v1038, %v1036
    %v1041 = vadd.s32 %v1023, 4294967256
    %v1042 = vperm.slane %v991, %v1041
    %vm1043 = vcmask 392512
    %v1044 = vsel %vm1043, %v1042, %v1040
    %v1045 = vadd.s32 %v1023, 4294967248
    %v1046 = vperm.slane %v994, %v1045
    %vm1047 = vcmask 458112
    %v1048 = vsel %vm1047, %v1046, %v1044
    %v1049 = vadd.s32 %v1023, 4294967240
    %v1050 = vperm.slane %v997, %v1049
    %vm1051 = vcmask 523712
    %v1052 = vsel %vm1051, %v1050, %v1048
    %v1053 = vadd.s32 %v1023, 4294967232
    %v1054 = vperm.slane %v1000, %v1053
    %vm1055 = vcmask 589312
    %v1056 = vsel %vm1055, %v1054, %v1052
    %v1057 = vadd.s32 %v1023, 4294967224
    %v1058 = vperm.slane %v1003, %v1057
    %vm1059 = vcmask 654912
    %v1060 = vsel %vm1059, %v1058, %v1056
    %v1061 = vadd.s32 %v1023, 4294967216
    %v1062 = vperm.slane %v1006, %v1061
    %vm1063 = vcmask 720512
    %v1064 = vsel %vm1063, %v1062, %v1060
    %v1065 = vadd.s32 %v1023, 4294967208
    %v1066 = vperm.slane %v1009, %v1065
    %vm1067 = vcmask 786112
    %v1068 = vsel %vm1067, %v1066, %v1064
    %v1069 = vadd.s32 %v1023, 4294967200
    %v1070 = vperm.slane %v1012, %v1069
    %vm1071 = vcmask 851712
    %v1072 = vsel %vm1071, %v1070, %v1068
    %v1073 = vadd.s32 %v1023, 4294967192
    %v1074 = vperm.slane %v1015, %v1073
    %vm1075 = vcmask 917312
    %v1076 = vsel %vm1075, %v1074, %v1072
    %v1077 = vadd.s32 %v1023, 4294967184
    %v1078 = vperm.slane %v1018, %v1077
    %vm1079 = vcmask 982912
    %v1080 = vsel %vm1079, %v1078, %v1076
    %v1081 = vadd.s32 %v1023, 4294967176
    %v1082 = vperm.slane %v1021, %v1081
    %vm1083 = vcmask 1048512
    %v1084 = vsel %vm1083, %v1082, %v1080
    %v1086 = vsub.f32 %v678, %v1084
    %1103 = vset.pattern.permute.xlu0 0
    %1104 = vperm.xlu0 %1103, %v662
    %v1105 = vpop.permute.xlu0 %1104
    %1106 = vset.pattern.permute.xlu0 0
    %1107 = vperm.xlu0 %1106, %v663
    %v1108 = vpop.permute.xlu0 %1107
    %1109 = vset.pattern.permute.xlu0 0
    %1110 = vperm.xlu0 %1109, %v664
    %v1111 = vpop.permute.xlu0 %1110
    %1112 = vset.pattern.permute.xlu0 0
    %1113 = vperm.xlu0 %1112, %v665
    %v1114 = vpop.permute.xlu0 %1113
    %1115 = vset.pattern.permute.xlu0 0
    %1116 = vperm.xlu0 %1115, %v666
    %v1117 = vpop.permute.xlu0 %1116
    %1118 = vset.pattern.permute.xlu0 0
    %1119 = vperm.xlu0 %1118, %v667
    %v1120 = vpop.permute.xlu0 %1119
    %1121 = vset.pattern.permute.xlu0 0
    %1122 = vperm.xlu0 %1121, %v668
    %v1123 = vpop.permute.xlu0 %1122
    %1124 = vset.pattern.permute.xlu0 0
    %1125 = vperm.xlu0 %1124, %v669
    %v1126 = vpop.permute.xlu0 %1125
    %1127 = vset.pattern.permute.xlu0 0
    %1128 = vperm.xlu0 %1127, %v670
    %v1129 = vpop.permute.xlu0 %1128
    %1130 = vset.pattern.permute.xlu0 0
    %1131 = vperm.xlu0 %1130, %v671
    %v1132 = vpop.permute.xlu0 %1131
    %1133 = vset.pattern.permute.xlu0 0
    %1134 = vperm.xlu0 %1133, %v672
    %v1135 = vpop.permute.xlu0 %1134
    %1136 = vset.pattern.permute.xlu0 0
    %1137 = vperm.xlu0 %1136, %v673
    %v1138 = vpop.permute.xlu0 %1137
    %1139 = vset.pattern.permute.xlu0 0
    %1140 = vperm.xlu0 %1139, %v674
    %v1141 = vpop.permute.xlu0 %1140
    %1142 = vset.pattern.permute.xlu0 0
    %1143 = vperm.xlu0 %1142, %v675
    %v1144 = vpop.permute.xlu0 %1143
    %1145 = vset.pattern.permute.xlu0 0
    %1146 = vperm.xlu0 %1145, %v676
    %v1147 = vpop.permute.xlu0 %1146
    %1148 = vset.pattern.permute.xlu0 0
    %1149 = vperm.xlu0 %1148, %v677
    %v1150 = vpop.permute.xlu0 %1149
    %v1151 = vperm.slane %v1105, %v1023
    %v1152 = vperm.slane %v1108, %v1025
    %v1153 = vsel %vm1027, %v1152, %v1151
    %v1154 = vperm.slane %v1111, %v1029
    %v1155 = vsel %vm1031, %v1154, %v1153
    %v1156 = vperm.slane %v1114, %v1033
    %v1157 = vsel %vm1035, %v1156, %v1155
    %v1158 = vperm.slane %v1117, %v1037
    %v1159 = vsel %vm1039, %v1158, %v1157
    %v1160 = vperm.slane %v1120, %v1041
    %v1161 = vsel %vm1043, %v1160, %v1159
    %v1162 = vperm.slane %v1123, %v1045
    %v1163 = vsel %vm1047, %v1162, %v1161
    %v1164 = vperm.slane %v1126, %v1049
    %v1165 = vsel %vm1051, %v1164, %v1163
    %v1166 = vperm.slane %v1129, %v1053
    %v1167 = vsel %vm1055, %v1166, %v1165
    %v1168 = vperm.slane %v1132, %v1057
    %v1169 = vsel %vm1059, %v1168, %v1167
    %v1170 = vperm.slane %v1135, %v1061
    %v1171 = vsel %vm1063, %v1170, %v1169
    %v1172 = vperm.slane %v1138, %v1065
    %v1173 = vsel %vm1067, %v1172, %v1171
    %v1174 = vperm.slane %v1141, %v1069
    %v1175 = vsel %vm1071, %v1174, %v1173
    %v1176 = vperm.slane %v1144, %v1073
    %v1177 = vsel %vm1075, %v1176, %v1175
    %v1178 = vperm.slane %v1147, %v1077
    %v1179 = vsel %vm1079, %v1178, %v1177
    %v1180 = vperm.slane %v1150, %v1081
    %v1181 = vsel %vm1083, %v1180, %v1179
    %vm1182 = vcmask 1042434
    %v1183 = vsel %vm1182, %v1181, %v1181
    %vm1184 = vcmask 1043459
    %v1185 = vsel %vm1184, %v1181, %v1183
    %vm1186 = vcmask 1044484
    %v1187 = vsel %vm1186, %v1181, %v1185
    %vm1188 = vcmask 1045509
    %v1189 = vsel %vm1188, %v1181, %v1187
    %vm1190 = vcmask 1046534
    %v1191 = vsel %vm1190, %v1181, %v1189
    %vm1192 = vcmask 1047559
    %v1193 = vsel %vm1192, %v1181, %v1191
    %v1195 = vmul.f32 %v95, %v1193
    %v1196 = vmul.f32 %v96, %v1193
    %v1197 = vmul.f32 %v97, %v1193
    %v1198 = vmul.f32 %v98, %v1193
    %v1199 = vmul.f32 %v99, %v1193
    %v1200 = vmul.f32 %v100, %v1193
    %v1201 = vmul.f32 %v101, %v1193
    %v1202 = vmul.f32 %v102, %v1193
    %v1203 = vmul.f32 %v103, %v1193
    %v1204 = vmul.f32 %v104, %v1193
    %v1205 = vmul.f32 %v105, %v1193
    %v1206 = vmul.f32 %v106, %v1193
    %v1207 = vmul.f32 %v107, %v1193
    %v1208 = vmul.f32 %v108, %v1193
    %v1209 = vmul.f32 %v109, %v1193
    %v1210 = vmul.f32 %v110, %v1193
    %v1211 = vmul.f32 %v111, %v1193
    %v1212 = vmul.f32 %v112, %v1193
    %v1213 = vmul.f32 %v113, %v1193
    %v1214 = vmul.f32 %v114, %v1193
    %v1215 = vmul.f32 %v115, %v1193
    %v1216 = vmul.f32 %v116, %v1193
    %v1217 = vmul.f32 %v117, %v1193
    %v1218 = vmul.f32 %v118, %v1193
    %v1219 = vmul.f32 %v119, %v1193
    %v1220 = vmul.f32 %v120, %v1193
    %v1221 = vmul.f32 %v121, %v1193
    %v1222 = vmul.f32 %v122, %v1193
    %v1223 = vmul.f32 %v123, %v1193
    %v1224 = vmul.f32 %v124, %v1193
    %v1225 = vmul.f32 %v125, %v1193
    %v1226 = vmul.f32 %v126, %v1193
    %v1227 = vmul.f32 %v127, %v1193
    %v1228 = vmul.f32 %v128, %v1193
    %v1229 = vmul.f32 %v129, %v1193
    %v1230 = vmul.f32 %v130, %v1193
    %v1231 = vmul.f32 %v131, %v1193
    %v1232 = vmul.f32 %v132, %v1193
    %v1233 = vmul.f32 %v133, %v1193
    %v1234 = vmul.f32 %v134, %v1193
    %v1235 = vmul.f32 %v135, %v1193
    %v1236 = vmul.f32 %v136, %v1193
    %v1237 = vmul.f32 %v137, %v1193
    %v1238 = vmul.f32 %v138, %v1193
    %v1239 = vmul.f32 %v139, %v1193
    %v1240 = vmul.f32 %v140, %v1193
    %v1241 = vmul.f32 %v141, %v1193
    %v1242 = vmul.f32 %v142, %v1193
    %v1243 = vmul.f32 %v143, %v1193
    %v1244 = vmul.f32 %v144, %v1193
    %v1245 = vmul.f32 %v145, %v1193
    %v1246 = vmul.f32 %v146, %v1193
    %v1247 = vmul.f32 %v147, %v1193
    %v1248 = vmul.f32 %v148, %v1193
    %v1249 = vmul.f32 %v149, %v1193
    %v1250 = vmul.f32 %v150, %v1193
    %v1251 = vmul.f32 %v151, %v1193
    %v1252 = vmul.f32 %v152, %v1193
    %v1253 = vmul.f32 %v153, %v1193
    %v1254 = vmul.f32 %v154, %v1193
    %v1255 = vmul.f32 %v155, %v1193
    %v1256 = vmul.f32 %v156, %v1193
    %v1257 = vmul.f32 %v157, %v1193
    %v1258 = vmul.f32 %v158, %v1193
    %v1259 = vmul.f32 %v159, %v1193
    %v1260 = vmul.f32 %v160, %v1193
    %v1261 = vmul.f32 %v161, %v1193
    %v1262 = vmul.f32 %v162, %v1193
    %v1263 = vmul.f32 %v163, %v1193
    %v1264 = vmul.f32 %v164, %v1193
    %v1265 = vmul.f32 %v165, %v1193
    %v1266 = vmul.f32 %v166, %v1193
    %v1267 = vmul.f32 %v167, %v1193
    %v1268 = vmul.f32 %v168, %v1193
    %v1269 = vmul.f32 %v169, %v1193
    %v1270 = vmul.f32 %v170, %v1193
    %v1271 = vmul.f32 %v171, %v1193
    %v1272 = vmul.f32 %v172, %v1193
    %v1273 = vmul.f32 %v173, %v1193
    %v1274 = vmul.f32 %v174, %v1193
    %v1275 = vmul.f32 %v175, %v1193
    %v1276 = vmul.f32 %v176, %v1193
    %v1277 = vmul.f32 %v177, %v1193
    %v1278 = vmul.f32 %v178, %v1193
    %v1280 = vperm.slane %v1086, 0
    %v1282 = vmul.f32 %v95, %v1280
    %v1283 = vmul.f32 %v96, %v1280
    %v1284 = vmul.f32 %v97, %v1280
    %v1285 = vmul.f32 %v98, %v1280
    %v1286 = vmul.f32 %v99, %v1280
    %v1287 = vmul.f32 %v100, %v1280
    %v1288 = vmul.f32 %v101, %v1280
    %v1289 = vmul.f32 %v102, %v1280
    %v1290 = vmul.f32 %v103, %v1280
    %v1291 = vmul.f32 %v104, %v1280
    %v1292 = vmul.f32 %v105, %v1280
    %v1293 = vmul.f32 %v106, %v1280
    %v1294 = vmul.f32 %v107, %v1280
    %v1295 = vmul.f32 %v108, %v1280
    %v1296 = vmul.f32 %v109, %v1280
    %v1297 = vmul.f32 %v110, %v1280
    %v1298 = vmul.f32 %v111, %v1280
    %v1299 = vmul.f32 %v112, %v1280
    %v1300 = vmul.f32 %v113, %v1280
    %v1301 = vmul.f32 %v114, %v1280
    %v1302 = vmul.f32 %v115, %v1280
    %v1303 = vmul.f32 %v116, %v1280
    %v1304 = vmul.f32 %v117, %v1280
    %v1305 = vmul.f32 %v118, %v1280
    %v1306 = vmul.f32 %v119, %v1280
    %v1307 = vmul.f32 %v120, %v1280
    %v1308 = vmul.f32 %v121, %v1280
    %v1309 = vmul.f32 %v122, %v1280
    %v1310 = vmul.f32 %v123, %v1280
    %v1311 = vmul.f32 %v124, %v1280
    %v1312 = vmul.f32 %v125, %v1280
    %v1313 = vmul.f32 %v126, %v1280
    %v1314 = vmul.f32 %v127, %v1280
    %v1315 = vmul.f32 %v128, %v1280
    %v1316 = vmul.f32 %v129, %v1280
    %v1317 = vmul.f32 %v130, %v1280
    %v1318 = vmul.f32 %v131, %v1280
    %v1319 = vmul.f32 %v132, %v1280
    %v1320 = vmul.f32 %v133, %v1280
    %v1321 = vmul.f32 %v134, %v1280
    %v1322 = vmul.f32 %v135, %v1280
    %v1323 = vmul.f32 %v136, %v1280
    %v1324 = vmul.f32 %v137, %v1280
    %v1325 = vmul.f32 %v138, %v1280
    %v1326 = vmul.f32 %v139, %v1280
    %v1327 = vmul.f32 %v140, %v1280
    %v1328 = vmul.f32 %v141, %v1280
    %v1329 = vmul.f32 %v142, %v1280
    %v1330 = vmul.f32 %v143, %v1280
    %v1331 = vmul.f32 %v144, %v1280
    %v1332 = vmul.f32 %v145, %v1280
    %v1333 = vmul.f32 %v146, %v1280
    %v1334 = vmul.f32 %v147, %v1280
    %v1335 = vmul.f32 %v148, %v1280
    %v1336 = vmul.f32 %v149, %v1280
    %v1337 = vmul.f32 %v150, %v1280
    %v1338 = vmul.f32 %v151, %v1280
    %v1339 = vmul.f32 %v152, %v1280
    %v1340 = vmul.f32 %v153, %v1280
    %v1341 = vmul.f32 %v154, %v1280
    %v1342 = vmul.f32 %v155, %v1280
    %v1343 = vmul.f32 %v156, %v1280
    %v1344 = vmul.f32 %v157, %v1280
    %v1345 = vmul.f32 %v158, %v1280
    %v1346 = vmul.f32 %v159, %v1280
    %v1347 = vmul.f32 %v160, %v1280
    %v1348 = vmul.f32 %v161, %v1280
    %v1349 = vmul.f32 %v162, %v1280
    %v1350 = vmul.f32 %v163, %v1280
    %v1351 = vmul.f32 %v164, %v1280
    %v1352 = vmul.f32 %v165, %v1280
    %v1353 = vmul.f32 %v166, %v1280
    %v1354 = vmul.f32 %v167, %v1280
    %v1355 = vmul.f32 %v168, %v1280
    %v1356 = vmul.f32 %v169, %v1280
    %v1357 = vmul.f32 %v170, %v1280
    %v1358 = vmul.f32 %v171, %v1280
    %v1359 = vmul.f32 %v172, %v1280
    %v1360 = vmul.f32 %v173, %v1280
    %v1361 = vmul.f32 %v174, %v1280
    %v1362 = vmul.f32 %v175, %v1280
    %v1363 = vmul.f32 %v176, %v1280
    %v1364 = vmul.f32 %v177, %v1280
    %v1365 = vmul.f32 %v178, %v1280
    %1366 = vadd.xlane.f32.xlu0 %v1282
    %v1367 = vpop.xlane.xlu0 %1366
    %1368 = vadd.xlane.f32.xlu0 %v1283
    %v1369 = vpop.xlane.xlu0 %1368
    %1370 = vadd.xlane.f32.xlu0 %v1284
    %v1371 = vpop.xlane.xlu0 %1370
    %1372 = vadd.xlane.f32.xlu0 %v1285
    %v1373 = vpop.xlane.xlu0 %1372
    %1374 = vadd.xlane.f32.xlu0 %v1286
    %v1375 = vpop.xlane.xlu0 %1374
    %1376 = vadd.xlane.f32.xlu0 %v1287
    %v1377 = vpop.xlane.xlu0 %1376
    %1378 = vadd.xlane.f32.xlu0 %v1288
    %v1379 = vpop.xlane.xlu0 %1378
    %1380 = vadd.xlane.f32.xlu0 %v1289
    %v1381 = vpop.xlane.xlu0 %1380
    %1382 = vadd.xlane.f32.xlu0 %v1290
    %v1383 = vpop.xlane.xlu0 %1382
    %1384 = vadd.xlane.f32.xlu0 %v1291
    %v1385 = vpop.xlane.xlu0 %1384
    %1386 = vadd.xlane.f32.xlu0 %v1292
    %v1387 = vpop.xlane.xlu0 %1386
    %1388 = vadd.xlane.f32.xlu0 %v1293
    %v1389 = vpop.xlane.xlu0 %1388
    %1390 = vadd.xlane.f32.xlu0 %v1294
    %v1391 = vpop.xlane.xlu0 %1390
    %1392 = vadd.xlane.f32.xlu0 %v1295
    %v1393 = vpop.xlane.xlu0 %1392
    %1394 = vadd.xlane.f32.xlu0 %v1296
    %v1395 = vpop.xlane.xlu0 %1394
    %1396 = vadd.xlane.f32.xlu0 %v1297
    %v1397 = vpop.xlane.xlu0 %1396
    %1398 = vadd.xlane.f32.xlu0 %v1298
    %v1399 = vpop.xlane.xlu0 %1398
    %1400 = vadd.xlane.f32.xlu0 %v1299
    %v1401 = vpop.xlane.xlu0 %1400
    %1402 = vadd.xlane.f32.xlu0 %v1300
    %v1403 = vpop.xlane.xlu0 %1402
    %1404 = vadd.xlane.f32.xlu0 %v1301
    %v1405 = vpop.xlane.xlu0 %1404
    %1406 = vadd.xlane.f32.xlu0 %v1302
    %v1407 = vpop.xlane.xlu0 %1406
    %1408 = vadd.xlane.f32.xlu0 %v1303
    %v1409 = vpop.xlane.xlu0 %1408
    %1410 = vadd.xlane.f32.xlu0 %v1304
    %v1411 = vpop.xlane.xlu0 %1410
    %1412 = vadd.xlane.f32.xlu0 %v1305
    %v1413 = vpop.xlane.xlu0 %1412
    %1414 = vadd.xlane.f32.xlu0 %v1306
    %v1415 = vpop.xlane.xlu0 %1414
    %1416 = vadd.xlane.f32.xlu0 %v1307
    %v1417 = vpop.xlane.xlu0 %1416
    %1418 = vadd.xlane.f32.xlu0 %v1308
    %v1419 = vpop.xlane.xlu0 %1418
    %1420 = vadd.xlane.f32.xlu0 %v1309
    %v1421 = vpop.xlane.xlu0 %1420
    %1422 = vadd.xlane.f32.xlu0 %v1310
    %v1423 = vpop.xlane.xlu0 %1422
    %1424 = vadd.xlane.f32.xlu0 %v1311
    %v1425 = vpop.xlane.xlu0 %1424
    %1426 = vadd.xlane.f32.xlu0 %v1312
    %v1427 = vpop.xlane.xlu0 %1426
    %1428 = vadd.xlane.f32.xlu0 %v1313
    %v1429 = vpop.xlane.xlu0 %1428
    %1430 = vadd.xlane.f32.xlu0 %v1314
    %v1431 = vpop.xlane.xlu0 %1430
    %1432 = vadd.xlane.f32.xlu0 %v1315
    %v1433 = vpop.xlane.xlu0 %1432
    %1434 = vadd.xlane.f32.xlu0 %v1316
    %v1435 = vpop.xlane.xlu0 %1434
    %1436 = vadd.xlane.f32.xlu0 %v1317
    %v1437 = vpop.xlane.xlu0 %1436
    %1438 = vadd.xlane.f32.xlu0 %v1318
    %v1439 = vpop.xlane.xlu0 %1438
    %1440 = vadd.xlane.f32.xlu0 %v1319
    %v1441 = vpop.xlane.xlu0 %1440
    %1442 = vadd.xlane.f32.xlu0 %v1320
    %v1443 = vpop.xlane.xlu0 %1442
    %1444 = vadd.xlane.f32.xlu0 %v1321
    %v1445 = vpop.xlane.xlu0 %1444
    %1446 = vadd.xlane.f32.xlu0 %v1322
    %v1447 = vpop.xlane.xlu0 %1446
    %1448 = vadd.xlane.f32.xlu0 %v1323
    %v1449 = vpop.xlane.xlu0 %1448
    %1450 = vadd.xlane.f32.xlu0 %v1324
    %v1451 = vpop.xlane.xlu0 %1450
    %1452 = vadd.xlane.f32.xlu0 %v1325
    %v1453 = vpop.xlane.xlu0 %1452
    %1454 = vadd.xlane.f32.xlu0 %v1326
    %v1455 = vpop.xlane.xlu0 %1454
    %1456 = vadd.xlane.f32.xlu0 %v1327
    %v1457 = vpop.xlane.xlu0 %1456
    %1458 = vadd.xlane.f32.xlu0 %v1328
    %v1459 = vpop.xlane.xlu0 %1458
    %1460 = vadd.xlane.f32.xlu0 %v1329
    %v1461 = vpop.xlane.xlu0 %1460
    %1462 = vadd.xlane.f32.xlu0 %v1330
    %v1463 = vpop.xlane.xlu0 %1462
    %1464 = vadd.xlane.f32.xlu0 %v1331
    %v1465 = vpop.xlane.xlu0 %1464
    %1466 = vadd.xlane.f32.xlu0 %v1332
    %v1467 = vpop.xlane.xlu0 %1466
    %1468 = vadd.xlane.f32.xlu0 %v1333
    %v1469 = vpop.xlane.xlu0 %1468
    %1470 = vadd.xlane.f32.xlu0 %v1334
    %v1471 = vpop.xlane.xlu0 %1470
    %1472 = vadd.xlane.f32.xlu0 %v1335
    %v1473 = vpop.xlane.xlu0 %1472
    %1474 = vadd.xlane.f32.xlu0 %v1336
    %v1475 = vpop.xlane.xlu0 %1474
    %1476 = vadd.xlane.f32.xlu0 %v1337
    %v1477 = vpop.xlane.xlu0 %1476
    %1478 = vadd.xlane.f32.xlu0 %v1338
    %v1479 = vpop.xlane.xlu0 %1478
    %1480 = vadd.xlane.f32.xlu0 %v1339
    %v1481 = vpop.xlane.xlu0 %1480
    %1482 = vadd.xlane.f32.xlu0 %v1340
    %v1483 = vpop.xlane.xlu0 %1482
    %1484 = vadd.xlane.f32.xlu0 %v1341
    %v1485 = vpop.xlane.xlu0 %1484
    %1486 = vadd.xlane.f32.xlu0 %v1342
    %v1487 = vpop.xlane.xlu0 %1486
    %1488 = vadd.xlane.f32.xlu0 %v1343
    %v1489 = vpop.xlane.xlu0 %1488
    %1490 = vadd.xlane.f32.xlu0 %v1344
    %v1491 = vpop.xlane.xlu0 %1490
    %1492 = vadd.xlane.f32.xlu0 %v1345
    %v1493 = vpop.xlane.xlu0 %1492
    %1494 = vadd.xlane.f32.xlu0 %v1346
    %v1495 = vpop.xlane.xlu0 %1494
    %1496 = vadd.xlane.f32.xlu0 %v1347
    %v1497 = vpop.xlane.xlu0 %1496
    %1498 = vadd.xlane.f32.xlu0 %v1348
    %v1499 = vpop.xlane.xlu0 %1498
    %1500 = vadd.xlane.f32.xlu0 %v1349
    %v1501 = vpop.xlane.xlu0 %1500
    %1502 = vadd.xlane.f32.xlu0 %v1350
    %v1503 = vpop.xlane.xlu0 %1502
    %1504 = vadd.xlane.f32.xlu0 %v1351
    %v1505 = vpop.xlane.xlu0 %1504
    %1506 = vadd.xlane.f32.xlu0 %v1352
    %v1507 = vpop.xlane.xlu0 %1506
    %1508 = vadd.xlane.f32.xlu0 %v1353
    %v1509 = vpop.xlane.xlu0 %1508
    %1510 = vadd.xlane.f32.xlu0 %v1354
    %v1511 = vpop.xlane.xlu0 %1510
    %1512 = vadd.xlane.f32.xlu0 %v1355
    %v1513 = vpop.xlane.xlu0 %1512
    %1514 = vadd.xlane.f32.xlu0 %v1356
    %v1515 = vpop.xlane.xlu0 %1514
    %1516 = vadd.xlane.f32.xlu0 %v1357
    %v1517 = vpop.xlane.xlu0 %1516
    %1518 = vadd.xlane.f32.xlu0 %v1358
    %v1519 = vpop.xlane.xlu0 %1518
    %1520 = vadd.xlane.f32.xlu0 %v1359
    %v1521 = vpop.xlane.xlu0 %1520
    %1522 = vadd.xlane.f32.xlu0 %v1360
    %v1523 = vpop.xlane.xlu0 %1522
    %1524 = vadd.xlane.f32.xlu0 %v1361
    %v1525 = vpop.xlane.xlu0 %1524
    %1526 = vadd.xlane.f32.xlu0 %v1362
    %v1527 = vpop.xlane.xlu0 %1526
    %1528 = vadd.xlane.f32.xlu0 %v1363
    %v1529 = vpop.xlane.xlu0 %1528
    %1530 = vadd.xlane.f32.xlu0 %v1364
    %v1531 = vpop.xlane.xlu0 %1530
    %1532 = vadd.xlane.f32.xlu0 %v1365
    %v1533 = vpop.xlane.xlu0 %1532
    %1534 = vmatpush.msra.mxu0 %v93
    %1535 = vmatpush.msra.mxu0 %v91
    %1536 = vmatpush.msra.mxu0 %v89
    %1537 = vmatpush.msra.mxu0 %v87
    %1538 = vmatpush.msra.mxu0 %v85
    %1539 = vmatpush.msra.mxu0 %v83
    %1540 = vmatpush.msra.mxu0 %v81
    %1541 = vmatpush.msra.mxu0 %v79
    %1542 = vmatpush.msra.mxu0 %v77
    %1543 = vmatpush.msra.mxu0 %v75
    %1544 = vmatpush.msra.mxu0 %v73
    %1545 = vmatpush.msra.mxu0 %v71
    %1546 = vmatpush.msra.mxu0 %v69
    %1547 = vmatpush.msra.mxu0 %v67
    %1548 = vmatpush.msra.mxu0 %v65
    %1549 = vmatpush.msra.mxu0 %v63
    %1550 = vmatmul.f32.gmra.mxu0 %v1195
    %v1551 = vpop.f32.mrf.mxu0
    %v1552 = vadd.f32 %v1367, %v1551
    %1553 = vmatmul.f32.gmra.mxu0 %v1196
    %v1554 = vpop.f32.mrf.mxu0
    %v1555 = vadd.f32 %v1369, %v1554
    %1556 = vmatmul.f32.gmra.mxu0 %v1197
    %v1557 = vpop.f32.mrf.mxu0
    %v1558 = vadd.f32 %v1371, %v1557
    %1559 = vmatmul.f32.gmra.mxu0 %v1198
    %v1560 = vpop.f32.mrf.mxu0
    %v1561 = vadd.f32 %v1373, %v1560
    %1562 = vmatmul.f32.gmra.mxu0 %v1199
    %v1563 = vpop.f32.mrf.mxu0
    %v1564 = vadd.f32 %v1375, %v1563
    %1565 = vmatmul.f32.gmra.mxu0 %v1200
    %v1566 = vpop.f32.mrf.mxu0
    %v1567 = vadd.f32 %v1377, %v1566
    %1568 = vmatmul.f32.gmra.mxu0 %v1201
    %v1569 = vpop.f32.mrf.mxu0
    %v1570 = vadd.f32 %v1379, %v1569
    %1571 = vmatmul.f32.gmra.mxu0 %v1202
    %v1572 = vpop.f32.mrf.mxu0
    %v1573 = vadd.f32 %v1381, %v1572
    %1574 = vmatmul.f32.gmra.mxu0 %v1203
    %v1575 = vpop.f32.mrf.mxu0
    %v1576 = vadd.f32 %v1383, %v1575
    %1577 = vmatmul.f32.gmra.mxu0 %v1204
    %v1578 = vpop.f32.mrf.mxu0
    %v1579 = vadd.f32 %v1385, %v1578
    %1580 = vmatmul.f32.gmra.mxu0 %v1205
    %v1581 = vpop.f32.mrf.mxu0
    %v1582 = vadd.f32 %v1387, %v1581
    %1583 = vmatmul.f32.gmra.mxu0 %v1206
    %v1584 = vpop.f32.mrf.mxu0
    %v1585 = vadd.f32 %v1389, %v1584
    %1586 = vmatmul.f32.gmra.mxu0 %v1207
    %v1587 = vpop.f32.mrf.mxu0
    %v1588 = vadd.f32 %v1391, %v1587
    %1589 = vmatmul.f32.gmra.mxu0 %v1208
    %v1590 = vpop.f32.mrf.mxu0
    %v1591 = vadd.f32 %v1393, %v1590
    %1592 = vmatmul.f32.gmra.mxu0 %v1209
    %v1593 = vpop.f32.mrf.mxu0
    %v1594 = vadd.f32 %v1395, %v1593
    %1595 = vmatmul.f32.gmra.mxu0 %v1210
    %v1596 = vpop.f32.mrf.mxu0
    %v1597 = vadd.f32 %v1397, %v1596
    %1598 = vmatmul.f32.gmra.mxu0 %v1211
    %v1599 = vpop.f32.mrf.mxu0
    %v1600 = vadd.f32 %v1399, %v1599
    %1601 = vmatmul.f32.gmra.mxu0 %v1212
    %v1602 = vpop.f32.mrf.mxu0
    %v1603 = vadd.f32 %v1401, %v1602
    %1604 = vmatmul.f32.gmra.mxu0 %v1213
    %v1605 = vpop.f32.mrf.mxu0
    %v1606 = vadd.f32 %v1403, %v1605
    %1607 = vmatmul.f32.gmra.mxu0 %v1214
    %v1608 = vpop.f32.mrf.mxu0
    %v1609 = vadd.f32 %v1405, %v1608
    %1610 = vmatmul.f32.gmra.mxu0 %v1215
    %v1611 = vpop.f32.mrf.mxu0
    %v1612 = vadd.f32 %v1407, %v1611
    %1613 = vmatmul.f32.gmra.mxu0 %v1216
    %v1614 = vpop.f32.mrf.mxu0
    %v1615 = vadd.f32 %v1409, %v1614
    %1616 = vmatmul.f32.gmra.mxu0 %v1217
    %v1617 = vpop.f32.mrf.mxu0
    %v1618 = vadd.f32 %v1411, %v1617
    %1619 = vmatmul.f32.gmra.mxu0 %v1218
    %v1620 = vpop.f32.mrf.mxu0
    %v1621 = vadd.f32 %v1413, %v1620
    %1622 = vmatmul.f32.gmra.mxu0 %v1219
    %v1623 = vpop.f32.mrf.mxu0
    %v1624 = vadd.f32 %v1415, %v1623
    %1625 = vmatmul.f32.gmra.mxu0 %v1220
    %v1626 = vpop.f32.mrf.mxu0
    %v1627 = vadd.f32 %v1417, %v1626
    %1628 = vmatmul.f32.gmra.mxu0 %v1221
    %v1629 = vpop.f32.mrf.mxu0
    %v1630 = vadd.f32 %v1419, %v1629
    %1631 = vmatmul.f32.gmra.mxu0 %v1222
    %v1632 = vpop.f32.mrf.mxu0
    %v1633 = vadd.f32 %v1421, %v1632
    %1634 = vmatmul.f32.gmra.mxu0 %v1223
    %v1635 = vpop.f32.mrf.mxu0
    %v1636 = vadd.f32 %v1423, %v1635
    %1637 = vmatmul.f32.gmra.mxu0 %v1224
    %v1638 = vpop.f32.mrf.mxu0
    %v1639 = vadd.f32 %v1425, %v1638
    %1640 = vmatmul.f32.gmra.mxu0 %v1225
    %v1641 = vpop.f32.mrf.mxu0
    %v1642 = vadd.f32 %v1427, %v1641
    %1643 = vmatmul.f32.gmra.mxu0 %v1226
    %v1644 = vpop.f32.mrf.mxu0
    %v1645 = vadd.f32 %v1429, %v1644
    %1646 = vmatmul.f32.gmra.mxu0 %v1227
    %v1647 = vpop.f32.mrf.mxu0
    %v1648 = vadd.f32 %v1431, %v1647
    %1649 = vmatmul.f32.gmra.mxu0 %v1228
    %v1650 = vpop.f32.mrf.mxu0
    %v1651 = vadd.f32 %v1433, %v1650
    %1652 = vmatmul.f32.gmra.mxu0 %v1229
    %v1653 = vpop.f32.mrf.mxu0
    %v1654 = vadd.f32 %v1435, %v1653
    %1655 = vmatmul.f32.gmra.mxu0 %v1230
    %v1656 = vpop.f32.mrf.mxu0
    %v1657 = vadd.f32 %v1437, %v1656
    %1658 = vmatmul.f32.gmra.mxu0 %v1231
    %v1659 = vpop.f32.mrf.mxu0
    %v1660 = vadd.f32 %v1439, %v1659
    %1661 = vmatmul.f32.gmra.mxu0 %v1232
    %v1662 = vpop.f32.mrf.mxu0
    %v1663 = vadd.f32 %v1441, %v1662
    %1664 = vmatmul.f32.gmra.mxu0 %v1233
    %v1665 = vpop.f32.mrf.mxu0
    %v1666 = vadd.f32 %v1443, %v1665
    %1667 = vmatmul.f32.gmra.mxu0 %v1234
    %v1668 = vpop.f32.mrf.mxu0
    %v1669 = vadd.f32 %v1445, %v1668
    %1670 = vmatmul.f32.gmra.mxu0 %v1235
    %v1671 = vpop.f32.mrf.mxu0
    %v1672 = vadd.f32 %v1447, %v1671
    %1673 = vmatmul.f32.gmra.mxu0 %v1236
    %v1674 = vpop.f32.mrf.mxu0
    %v1675 = vadd.f32 %v1449, %v1674
    %1676 = vmatmul.f32.gmra.mxu0 %v1237
    %v1677 = vpop.f32.mrf.mxu0
    %v1678 = vadd.f32 %v1451, %v1677
    %1679 = vmatmul.f32.gmra.mxu0 %v1238
    %v1680 = vpop.f32.mrf.mxu0
    %v1681 = vadd.f32 %v1453, %v1680
    %1682 = vmatmul.f32.gmra.mxu0 %v1239
    %v1683 = vpop.f32.mrf.mxu0
    %v1684 = vadd.f32 %v1455, %v1683
    %1685 = vmatmul.f32.gmra.mxu0 %v1240
    %v1686 = vpop.f32.mrf.mxu0
    %v1687 = vadd.f32 %v1457, %v1686
    %1688 = vmatmul.f32.gmra.mxu0 %v1241
    %v1689 = vpop.f32.mrf.mxu0
    %v1690 = vadd.f32 %v1459, %v1689
    %1691 = vmatmul.f32.gmra.mxu0 %v1242
    %v1692 = vpop.f32.mrf.mxu0
    %v1693 = vadd.f32 %v1461, %v1692
    %1694 = vmatmul.f32.gmra.mxu0 %v1243
    %v1695 = vpop.f32.mrf.mxu0
    %v1696 = vadd.f32 %v1463, %v1695
    %1697 = vmatmul.f32.gmra.mxu0 %v1244
    %v1698 = vpop.f32.mrf.mxu0
    %v1699 = vadd.f32 %v1465, %v1698
    %1700 = vmatmul.f32.gmra.mxu0 %v1245
    %v1701 = vpop.f32.mrf.mxu0
    %v1702 = vadd.f32 %v1467, %v1701
    %1703 = vmatmul.f32.gmra.mxu0 %v1246
    %v1704 = vpop.f32.mrf.mxu0
    %v1705 = vadd.f32 %v1469, %v1704
    %1706 = vmatmul.f32.gmra.mxu0 %v1247
    %v1707 = vpop.f32.mrf.mxu0
    %v1708 = vadd.f32 %v1471, %v1707
    %1709 = vmatmul.f32.gmra.mxu0 %v1248
    %v1710 = vpop.f32.mrf.mxu0
    %v1711 = vadd.f32 %v1473, %v1710
    %1712 = vmatmul.f32.gmra.mxu0 %v1249
    %v1713 = vpop.f32.mrf.mxu0
    %v1714 = vadd.f32 %v1475, %v1713
    %1715 = vmatmul.f32.gmra.mxu0 %v1250
    %v1716 = vpop.f32.mrf.mxu0
    %v1717 = vadd.f32 %v1477, %v1716
    %1718 = vmatmul.f32.gmra.mxu0 %v1251
    %v1719 = vpop.f32.mrf.mxu0
    %v1720 = vadd.f32 %v1479, %v1719
    %1721 = vmatmul.f32.gmra.mxu0 %v1252
    %v1722 = vpop.f32.mrf.mxu0
    %v1723 = vadd.f32 %v1481, %v1722
    %1724 = vmatmul.f32.gmra.mxu0 %v1253
    %v1725 = vpop.f32.mrf.mxu0
    %v1726 = vadd.f32 %v1483, %v1725
    %1727 = vmatmul.f32.gmra.mxu0 %v1254
    %v1728 = vpop.f32.mrf.mxu0
    %v1729 = vadd.f32 %v1485, %v1728
    %1730 = vmatmul.f32.gmra.mxu0 %v1255
    %v1731 = vpop.f32.mrf.mxu0
    %v1732 = vadd.f32 %v1487, %v1731
    %1733 = vmatmul.f32.gmra.mxu0 %v1256
    %v1734 = vpop.f32.mrf.mxu0
    %v1735 = vadd.f32 %v1489, %v1734
    %1736 = vmatmul.f32.gmra.mxu0 %v1257
    %v1737 = vpop.f32.mrf.mxu0
    %v1738 = vadd.f32 %v1491, %v1737
    %1739 = vmatmul.f32.gmra.mxu0 %v1258
    %v1740 = vpop.f32.mrf.mxu0
    %v1741 = vadd.f32 %v1493, %v1740
    %1742 = vmatmul.f32.gmra.mxu0 %v1259
    %v1743 = vpop.f32.mrf.mxu0
    %v1744 = vadd.f32 %v1495, %v1743
    %1745 = vmatmul.f32.gmra.mxu0 %v1260
    %v1746 = vpop.f32.mrf.mxu0
    %v1747 = vadd.f32 %v1497, %v1746
    %1748 = vmatmul.f32.gmra.mxu0 %v1261
    %v1749 = vpop.f32.mrf.mxu0
    %v1750 = vadd.f32 %v1499, %v1749
    %1751 = vmatmul.f32.gmra.mxu0 %v1262
    %v1752 = vpop.f32.mrf.mxu0
    %v1753 = vadd.f32 %v1501, %v1752
    %1754 = vmatmul.f32.gmra.mxu0 %v1263
    %v1755 = vpop.f32.mrf.mxu0
    %v1756 = vadd.f32 %v1503, %v1755
    %1757 = vmatmul.f32.gmra.mxu0 %v1264
    %v1758 = vpop.f32.mrf.mxu0
    %v1759 = vadd.f32 %v1505, %v1758
    %1760 = vmatmul.f32.gmra.mxu0 %v1265
    %v1761 = vpop.f32.mrf.mxu0
    %v1762 = vadd.f32 %v1507, %v1761
    %1763 = vmatmul.f32.gmra.mxu0 %v1266
    %v1764 = vpop.f32.mrf.mxu0
    %v1765 = vadd.f32 %v1509, %v1764
    %1766 = vmatmul.f32.gmra.mxu0 %v1267
    %v1767 = vpop.f32.mrf.mxu0
    %v1768 = vadd.f32 %v1511, %v1767
    %1769 = vmatmul.f32.gmra.mxu0 %v1268
    %v1770 = vpop.f32.mrf.mxu0
    %v1771 = vadd.f32 %v1513, %v1770
    %1772 = vmatmul.f32.gmra.mxu0 %v1269
    %v1773 = vpop.f32.mrf.mxu0
    %v1774 = vadd.f32 %v1515, %v1773
    %1775 = vmatmul.f32.gmra.mxu0 %v1270
    %v1776 = vpop.f32.mrf.mxu0
    %v1777 = vadd.f32 %v1517, %v1776
    %1778 = vmatmul.f32.gmra.mxu0 %v1271
    %v1779 = vpop.f32.mrf.mxu0
    %v1780 = vadd.f32 %v1519, %v1779
    %1781 = vmatmul.f32.gmra.mxu0 %v1272
    %v1782 = vpop.f32.mrf.mxu0
    %v1783 = vadd.f32 %v1521, %v1782
    %1784 = vmatmul.f32.gmra.mxu0 %v1273
    %v1785 = vpop.f32.mrf.mxu0
    %v1786 = vadd.f32 %v1523, %v1785
    %1787 = vmatmul.f32.gmra.mxu0 %v1274
    %v1788 = vpop.f32.mrf.mxu0
    %v1789 = vadd.f32 %v1525, %v1788
    %1790 = vmatmul.f32.gmra.mxu0 %v1275
    %v1791 = vpop.f32.mrf.mxu0
    %v1792 = vadd.f32 %v1527, %v1791
    %1793 = vmatmul.f32.gmra.mxu0 %v1276
    %v1794 = vpop.f32.mrf.mxu0
    %v1795 = vadd.f32 %v1529, %v1794
    %1796 = vmatmul.f32.gmra.mxu0 %v1277
    %v1797 = vpop.f32.mrf.mxu0
    %v1798 = vadd.f32 %v1531, %v1797
    %1799 = vmatmul.f32.gmra.mxu0 %v1278
    %v1800 = vpop.f32.mrf.mxu0
    %v1801 = vadd.f32 %v1533, %v1800
    %1802 = vdwg.mxu0
    %1803 = vmatpush.msra.mxu0 %v94
    %1804 = vmatpush.msra.mxu0 %v92
    %1805 = vmatpush.msra.mxu0 %v90
    %1806 = vmatpush.msra.mxu0 %v88
    %1807 = vmatpush.msra.mxu0 %v86
    %1808 = vmatpush.msra.mxu0 %v84
    %1809 = vmatpush.msra.mxu0 %v82
    %1810 = vmatpush.msra.mxu0 %v80
    %1811 = vmatpush.msra.mxu0 %v78
    %1812 = vmatpush.msra.mxu0 %v76
    %1813 = vmatpush.msra.mxu0 %v74
    %1814 = vmatpush.msra.mxu0 %v72
    %1815 = vmatpush.msra.mxu0 %v70
    %1816 = vmatpush.msra.mxu0 %v68
    %1817 = vmatpush.msra.mxu0 %v66
    %1818 = vmatpush.msra.mxu0 %v64
    %1819 = vmatmul.f32.gmra.mxu0 %v1195
    %v1820 = vpop.f32.mrf.mxu0
    %v1821 = vadd.f32 %v1367, %v1820
    %1822 = vmatmul.f32.gmra.mxu0 %v1196
    %v1823 = vpop.f32.mrf.mxu0
    %v1824 = vadd.f32 %v1369, %v1823
    %1825 = vmatmul.f32.gmra.mxu0 %v1197
    %v1826 = vpop.f32.mrf.mxu0
    %v1827 = vadd.f32 %v1371, %v1826
    %1828 = vmatmul.f32.gmra.mxu0 %v1198
    %v1829 = vpop.f32.mrf.mxu0
    %v1830 = vadd.f32 %v1373, %v1829
    %1831 = vmatmul.f32.gmra.mxu0 %v1199
    %v1832 = vpop.f32.mrf.mxu0
    %v1833 = vadd.f32 %v1375, %v1832
    %1834 = vmatmul.f32.gmra.mxu0 %v1200
    %v1835 = vpop.f32.mrf.mxu0
    %v1836 = vadd.f32 %v1377, %v1835
    %1837 = vmatmul.f32.gmra.mxu0 %v1201
    %v1838 = vpop.f32.mrf.mxu0
    %v1839 = vadd.f32 %v1379, %v1838
    %1840 = vmatmul.f32.gmra.mxu0 %v1202
    %v1841 = vpop.f32.mrf.mxu0
    %v1842 = vadd.f32 %v1381, %v1841
    %1843 = vmatmul.f32.gmra.mxu0 %v1203
    %v1844 = vpop.f32.mrf.mxu0
    %v1845 = vadd.f32 %v1383, %v1844
    %1846 = vmatmul.f32.gmra.mxu0 %v1204
    %v1847 = vpop.f32.mrf.mxu0
    %v1848 = vadd.f32 %v1385, %v1847
    %1849 = vmatmul.f32.gmra.mxu0 %v1205
    %v1850 = vpop.f32.mrf.mxu0
    %v1851 = vadd.f32 %v1387, %v1850
    %1852 = vmatmul.f32.gmra.mxu0 %v1206
    %v1853 = vpop.f32.mrf.mxu0
    %v1854 = vadd.f32 %v1389, %v1853
    %1855 = vmatmul.f32.gmra.mxu0 %v1207
    %v1856 = vpop.f32.mrf.mxu0
    %v1857 = vadd.f32 %v1391, %v1856
    %1858 = vmatmul.f32.gmra.mxu0 %v1208
    %v1859 = vpop.f32.mrf.mxu0
    %v1860 = vadd.f32 %v1393, %v1859
    %1861 = vmatmul.f32.gmra.mxu0 %v1209
    %v1862 = vpop.f32.mrf.mxu0
    %v1863 = vadd.f32 %v1395, %v1862
    %1864 = vmatmul.f32.gmra.mxu0 %v1210
    %v1865 = vpop.f32.mrf.mxu0
    %v1866 = vadd.f32 %v1397, %v1865
    %1867 = vmatmul.f32.gmra.mxu0 %v1211
    %v1868 = vpop.f32.mrf.mxu0
    %v1869 = vadd.f32 %v1399, %v1868
    %1870 = vmatmul.f32.gmra.mxu0 %v1212
    %v1871 = vpop.f32.mrf.mxu0
    %v1872 = vadd.f32 %v1401, %v1871
    %1873 = vmatmul.f32.gmra.mxu0 %v1213
    %v1874 = vpop.f32.mrf.mxu0
    %v1875 = vadd.f32 %v1403, %v1874
    %1876 = vmatmul.f32.gmra.mxu0 %v1214
    %v1877 = vpop.f32.mrf.mxu0
    %v1878 = vadd.f32 %v1405, %v1877
    %1879 = vmatmul.f32.gmra.mxu0 %v1215
    %v1880 = vpop.f32.mrf.mxu0
    %v1881 = vadd.f32 %v1407, %v1880
    %1882 = vmatmul.f32.gmra.mxu0 %v1216
    %v1883 = vpop.f32.mrf.mxu0
    %v1884 = vadd.f32 %v1409, %v1883
    %1885 = vmatmul.f32.gmra.mxu0 %v1217
    %v1886 = vpop.f32.mrf.mxu0
    %v1887 = vadd.f32 %v1411, %v1886
    %1888 = vmatmul.f32.gmra.mxu0 %v1218
    %v1889 = vpop.f32.mrf.mxu0
    %v1890 = vadd.f32 %v1413, %v1889
    %1891 = vmatmul.f32.gmra.mxu0 %v1219
    %v1892 = vpop.f32.mrf.mxu0
    %v1893 = vadd.f32 %v1415, %v1892
    %1894 = vmatmul.f32.gmra.mxu0 %v1220
    %v1895 = vpop.f32.mrf.mxu0
    %v1896 = vadd.f32 %v1417, %v1895
    %1897 = vmatmul.f32.gmra.mxu0 %v1221
    %v1898 = vpop.f32.mrf.mxu0
    %v1899 = vadd.f32 %v1419, %v1898
    %1900 = vmatmul.f32.gmra.mxu0 %v1222
    %v1901 = vpop.f32.mrf.mxu0
    %v1902 = vadd.f32 %v1421, %v1901
    %1903 = vmatmul.f32.gmra.mxu0 %v1223
    %v1904 = vpop.f32.mrf.mxu0
    %v1905 = vadd.f32 %v1423, %v1904
    %1906 = vmatmul.f32.gmra.mxu0 %v1224
    %v1907 = vpop.f32.mrf.mxu0
    %v1908 = vadd.f32 %v1425, %v1907
    %1909 = vmatmul.f32.gmra.mxu0 %v1225
    %v1910 = vpop.f32.mrf.mxu0
    %v1911 = vadd.f32 %v1427, %v1910
    %1912 = vmatmul.f32.gmra.mxu0 %v1226
    %v1913 = vpop.f32.mrf.mxu0
    %v1914 = vadd.f32 %v1429, %v1913
    %1915 = vmatmul.f32.gmra.mxu0 %v1227
    %v1916 = vpop.f32.mrf.mxu0
    %v1917 = vadd.f32 %v1431, %v1916
    %1918 = vmatmul.f32.gmra.mxu0 %v1228
    %v1919 = vpop.f32.mrf.mxu0
    %v1920 = vadd.f32 %v1433, %v1919
    %1921 = vmatmul.f32.gmra.mxu0 %v1229
    %v1922 = vpop.f32.mrf.mxu0
    %v1923 = vadd.f32 %v1435, %v1922
    %1924 = vmatmul.f32.gmra.mxu0 %v1230
    %v1925 = vpop.f32.mrf.mxu0
    %v1926 = vadd.f32 %v1437, %v1925
    %1927 = vmatmul.f32.gmra.mxu0 %v1231
    %v1928 = vpop.f32.mrf.mxu0
    %v1929 = vadd.f32 %v1439, %v1928
    %1930 = vmatmul.f32.gmra.mxu0 %v1232
    %v1931 = vpop.f32.mrf.mxu0
    %v1932 = vadd.f32 %v1441, %v1931
    %1933 = vmatmul.f32.gmra.mxu0 %v1233
    %v1934 = vpop.f32.mrf.mxu0
    %v1935 = vadd.f32 %v1443, %v1934
    %1936 = vmatmul.f32.gmra.mxu0 %v1234
    %v1937 = vpop.f32.mrf.mxu0
    %v1938 = vadd.f32 %v1445, %v1937
    %1939 = vmatmul.f32.gmra.mxu0 %v1235
    %v1940 = vpop.f32.mrf.mxu0
    %v1941 = vadd.f32 %v1447, %v1940
    %1942 = vmatmul.f32.gmra.mxu0 %v1236
    %v1943 = vpop.f32.mrf.mxu0
    %v1944 = vadd.f32 %v1449, %v1943
    %1945 = vmatmul.f32.gmra.mxu0 %v1237
    %v1946 = vpop.f32.mrf.mxu0
    %v1947 = vadd.f32 %v1451, %v1946
    %1948 = vmatmul.f32.gmra.mxu0 %v1238
    %v1949 = vpop.f32.mrf.mxu0
    %v1950 = vadd.f32 %v1453, %v1949
    %1951 = vmatmul.f32.gmra.mxu0 %v1239
    %v1952 = vpop.f32.mrf.mxu0
    %v1953 = vadd.f32 %v1455, %v1952
    %1954 = vmatmul.f32.gmra.mxu0 %v1240
    %v1955 = vpop.f32.mrf.mxu0
    %v1956 = vadd.f32 %v1457, %v1955
    %1957 = vmatmul.f32.gmra.mxu0 %v1241
    %v1958 = vpop.f32.mrf.mxu0
    %v1959 = vadd.f32 %v1459, %v1958
    %1960 = vmatmul.f32.gmra.mxu0 %v1242
    %v1961 = vpop.f32.mrf.mxu0
    %v1962 = vadd.f32 %v1461, %v1961
    %1963 = vmatmul.f32.gmra.mxu0 %v1243
    %v1964 = vpop.f32.mrf.mxu0
    %v1965 = vadd.f32 %v1463, %v1964
    %1966 = vmatmul.f32.gmra.mxu0 %v1244
    %v1967 = vpop.f32.mrf.mxu0
    %v1968 = vadd.f32 %v1465, %v1967
    %1969 = vmatmul.f32.gmra.mxu0 %v1245
    %v1970 = vpop.f32.mrf.mxu0
    %v1971 = vadd.f32 %v1467, %v1970
    %1972 = vmatmul.f32.gmra.mxu0 %v1246
    %v1973 = vpop.f32.mrf.mxu0
    %v1974 = vadd.f32 %v1469, %v1973
    %1975 = vmatmul.f32.gmra.mxu0 %v1247
    %v1976 = vpop.f32.mrf.mxu0
    %v1977 = vadd.f32 %v1471, %v1976
    %1978 = vmatmul.f32.gmra.mxu0 %v1248
    %v1979 = vpop.f32.mrf.mxu0
    %v1980 = vadd.f32 %v1473, %v1979
    %1981 = vmatmul.f32.gmra.mxu0 %v1249
    %v1982 = vpop.f32.mrf.mxu0
    %v1983 = vadd.f32 %v1475, %v1982
    %1984 = vmatmul.f32.gmra.mxu0 %v1250
    %v1985 = vpop.f32.mrf.mxu0
    %v1986 = vadd.f32 %v1477, %v1985
    %1987 = vmatmul.f32.gmra.mxu0 %v1251
    %v1988 = vpop.f32.mrf.mxu0
    %v1989 = vadd.f32 %v1479, %v1988
    %1990 = vmatmul.f32.gmra.mxu0 %v1252
    %v1991 = vpop.f32.mrf.mxu0
    %v1992 = vadd.f32 %v1481, %v1991
    %1993 = vmatmul.f32.gmra.mxu0 %v1253
    %v1994 = vpop.f32.mrf.mxu0
    %v1995 = vadd.f32 %v1483, %v1994
    %1996 = vmatmul.f32.gmra.mxu0 %v1254
    %v1997 = vpop.f32.mrf.mxu0
    %v1998 = vadd.f32 %v1485, %v1997
    %1999 = vmatmul.f32.gmra.mxu0 %v1255
    %v2000 = vpop.f32.mrf.mxu0
    %v2001 = vadd.f32 %v1487, %v2000
    %2002 = vmatmul.f32.gmra.mxu0 %v1256
    %v2003 = vpop.f32.mrf.mxu0
    %v2004 = vadd.f32 %v1489, %v2003
    %2005 = vmatmul.f32.gmra.mxu0 %v1257
    %v2006 = vpop.f32.mrf.mxu0
    %v2007 = vadd.f32 %v1491, %v2006
    %2008 = vmatmul.f32.gmra.mxu0 %v1258
    %v2009 = vpop.f32.mrf.mxu0
    %v2010 = vadd.f32 %v1493, %v2009
    %2011 = vmatmul.f32.gmra.mxu0 %v1259
    %v2012 = vpop.f32.mrf.mxu0
    %v2013 = vadd.f32 %v1495, %v2012
    %2014 = vmatmul.f32.gmra.mxu0 %v1260
    %v2015 = vpop.f32.mrf.mxu0
    %v2016 = vadd.f32 %v1497, %v2015
    %2017 = vmatmul.f32.gmra.mxu0 %v1261
    %v2018 = vpop.f32.mrf.mxu0
    %v2019 = vadd.f32 %v1499, %v2018
    %2020 = vmatmul.f32.gmra.mxu0 %v1262
    %v2021 = vpop.f32.mrf.mxu0
    %v2022 = vadd.f32 %v1501, %v2021
    %2023 = vmatmul.f32.gmra.mxu0 %v1263
    %v2024 = vpop.f32.mrf.mxu0
    %v2025 = vadd.f32 %v1503, %v2024
    %2026 = vmatmul.f32.gmra.mxu0 %v1264
    %v2027 = vpop.f32.mrf.mxu0
    %v2028 = vadd.f32 %v1505, %v2027
    %2029 = vmatmul.f32.gmra.mxu0 %v1265
    %v2030 = vpop.f32.mrf.mxu0
    %v2031 = vadd.f32 %v1507, %v2030
    %2032 = vmatmul.f32.gmra.mxu0 %v1266
    %v2033 = vpop.f32.mrf.mxu0
    %v2034 = vadd.f32 %v1509, %v2033
    %2035 = vmatmul.f32.gmra.mxu0 %v1267
    %v2036 = vpop.f32.mrf.mxu0
    %v2037 = vadd.f32 %v1511, %v2036
    %2038 = vmatmul.f32.gmra.mxu0 %v1268
    %v2039 = vpop.f32.mrf.mxu0
    %v2040 = vadd.f32 %v1513, %v2039
    %2041 = vmatmul.f32.gmra.mxu0 %v1269
    %v2042 = vpop.f32.mrf.mxu0
    %v2043 = vadd.f32 %v1515, %v2042
    %2044 = vmatmul.f32.gmra.mxu0 %v1270
    %v2045 = vpop.f32.mrf.mxu0
    %v2046 = vadd.f32 %v1517, %v2045
    %2047 = vmatmul.f32.gmra.mxu0 %v1271
    %v2048 = vpop.f32.mrf.mxu0
    %v2049 = vadd.f32 %v1519, %v2048
    %2050 = vmatmul.f32.gmra.mxu0 %v1272
    %v2051 = vpop.f32.mrf.mxu0
    %v2052 = vadd.f32 %v1521, %v2051
    %2053 = vmatmul.f32.gmra.mxu0 %v1273
    %v2054 = vpop.f32.mrf.mxu0
    %v2055 = vadd.f32 %v1523, %v2054
    %2056 = vmatmul.f32.gmra.mxu0 %v1274
    %v2057 = vpop.f32.mrf.mxu0
    %v2058 = vadd.f32 %v1525, %v2057
    %2059 = vmatmul.f32.gmra.mxu0 %v1275
    %v2060 = vpop.f32.mrf.mxu0
    %v2061 = vadd.f32 %v1527, %v2060
    %2062 = vmatmul.f32.gmra.mxu0 %v1276
    %v2063 = vpop.f32.mrf.mxu0
    %v2064 = vadd.f32 %v1529, %v2063
    %2065 = vmatmul.f32.gmra.mxu0 %v1277
    %v2066 = vpop.f32.mrf.mxu0
    %v2067 = vadd.f32 %v1531, %v2066
    %2068 = vmatmul.f32.gmra.mxu0 %v1278
    %v2069 = vpop.f32.mrf.mxu0
    %v2070 = vadd.f32 %v1533, %v2069
    %2071 = vdwg.mxu0
    %2072 = vst [vmem:[#allocation8] sm:$0xff] %v1552
    %2073 = vst [vmem:[#allocation8 + $0x8] sm:$0xff] %v1821
    %2074 = vst [vmem:[#allocation8 + $0x10] sm:$0xff] %v1555
    %2075 = vst [vmem:[#allocation8 + $0x18] sm:$0xff] %v1824
    %2076 = vst [vmem:[#allocation8 + $0x20] sm:$0xff] %v1558
    %2077 = vst [vmem:[#allocation8 + $0x28] sm:$0xff] %v1827
    %2078 = vst [vmem:[#allocation8 + $0x30] sm:$0xff] %v1561
    %2079 = vst [vmem:[#allocation8 + $0x38] sm:$0xff] %v1830
    %2080 = vst [vmem:[#allocation8 + $0x40] sm:$0xff] %v1564
    %2081 = vst [vmem:[#allocation8 + $0x48] sm:$0xff] %v1833
    %2082 = vst [vmem:[#allocation8 + $0x50] sm:$0xff] %v1567
    %2083 = vst [vmem:[#allocation8 + $0x58] sm:$0xff] %v1836
    %2084 = vst [vmem:[#allocation8 + $0x60] sm:$0xff] %v1570
    %2085 = vst [vmem:[#allocation8 + $0x68] sm:$0xff] %v1839
    %2086 = vst [vmem:[#allocation8 + $0x70] sm:$0xff] %v1573
    %2087 = vst [vmem:[#allocation8 + $0x78] sm:$0xff] %v1842
    %2088 = vst [vmem:[#allocation8 + $0x80] sm:$0xff] %v1576
    %2089 = vst [vmem:[#allocation8 + $0x88] sm:$0xff] %v1845
    %2090 = vst [vmem:[#allocation8 + $0x90] sm:$0xff] %v1579
    %2091 = vst [vmem:[#allocation8 + $0x98] sm:$0xff] %v1848
    %2092 = vst [vmem:[#allocation8 + $0xa0] sm:$0xff] %v1582
    %2093 = vst [vmem:[#allocation8 + $0xa8] sm:$0xff] %v1851
    %2094 = vst [vmem:[#allocation8 + $0xb0] sm:$0xff] %v1585
    %2095 = vst [vmem:[#allocation8 + $0xb8] sm:$0xff] %v1854
    %2096 = vst [vmem:[#allocation8 + $0xc0] sm:$0xff] %v1588
    %2097 = vst [vmem:[#allocation8 + $0xc8] sm:$0xff] %v1857
    %2098 = vst [vmem:[#allocation8 + $0xd0] sm:$0xff] %v1591
    %2099 = vst [vmem:[#allocation8 + $0xd8] sm:$0xff] %v1860
    %2100 = vst [vmem:[#allocation8 + $0xe0] sm:$0xff] %v1594
    %2101 = vst [vmem:[#allocation8 + $0xe8] sm:$0xff] %v1863
    %2102 = vst [vmem:[#allocation8 + $0xf0] sm:$0xff] %v1597
    %2103 = vst [vmem:[#allocation8 + $0xf8] sm:$0xff] %v1866
    %2104 = vst [vmem:[#allocation8 + $0x100] sm:$0xff] %v1600
    %2105 = vst [vmem:[#allocation8 + $0x108] sm:$0xff] %v1869
    %2106 = vst [vmem:[#allocation8 + $0x110] sm:$0xff] %v1603
    %2107 = vst [vmem:[#allocation8 + $0x118] sm:$0xff] %v1872
    %2108 = vst [vmem:[#allocation8 + $0x120] sm:$0xff] %v1606
    %2109 = vst [vmem:[#allocation8 + $0x128] sm:$0xff] %v1875
    %2110 = vst [vmem:[#allocation8 + $0x130] sm:$0xff] %v1609
    %2111 = vst [vmem:[#allocation8 + $0x138] sm:$0xff] %v1878
    %2112 = vst [vmem:[#allocation8 + $0x140] sm:$0xff] %v1612
    %2113 = vst [vmem:[#allocation8 + $0x148] sm:$0xff] %v1881
    %2114 = vst [vmem:[#allocation8 + $0x150] sm:$0xff] %v1615
    %2115 = vst [vmem:[#allocation8 + $0x158] sm:$0xff] %v1884
    %2116 = vst [vmem:[#allocation8 + $0x160] sm:$0xff] %v1618
    %2117 = vst [vmem:[#allocation8 + $0x168] sm:$0xff] %v1887
    %2118 = vst [vmem:[#allocation8 + $0x170] sm:$0xff] %v1621
    %2119 = vst [vmem:[#allocation8 + $0x178] sm:$0xff] %v1890
    %2120 = vst [vmem:[#allocation8 + $0x180] sm:$0xff] %v1624
    %2121 = vst [vmem:[#allocation8 + $0x188] sm:$0xff] %v1893
    %2122 = vst [vmem:[#allocation8 + $0x190] sm:$0xff] %v1627
    %2123 = vst [vmem:[#allocation8 + $0x198] sm:$0xff] %v1896
    %2124 = vst [vmem:[#allocation8 + $0x1a0] sm:$0xff] %v1630
    %2125 = vst [vmem:[#allocation8 + $0x1a8] sm:$0xff] %v1899
    %2126 = vst [vmem:[#allocation8 + $0x1b0] sm:$0xff] %v1633
    %2127 = vst [vmem:[#allocation8 + $0x1b8] sm:$0xff] %v1902
    %2128 = vst [vmem:[#allocation8 + $0x1c0] sm:$0xff] %v1636
    %2129 = vst [vmem:[#allocation8 + $0x1c8] sm:$0xff] %v1905
    %2130 = vst [vmem:[#allocation8 + $0x1d0] sm:$0xff] %v1639
    %2131 = vst [vmem:[#allocation8 + $0x1d8] sm:$0xff] %v1908
    %2132 = vst [vmem:[#allocation8 + $0x1e0] sm:$0xff] %v1642
    %2133 = vst [vmem:[#allocation8 + $0x1e8] sm:$0xff] %v1911
    %2134 = vst [vmem:[#allocation8 + $0x1f0] sm:$0xff] %v1645
    %2135 = vst [vmem:[#allocation8 + $0x1f8] sm:$0xff] %v1914
    %2136 = vst [vmem:[#allocation8 + $0x200] sm:$0xff] %v1648
    %2137 = vst [vmem:[#allocation8 + $0x208] sm:$0xff] %v1917
    %2138 = vst [vmem:[#allocation8 + $0x210] sm:$0xff] %v1651
    %2139 = vst [vmem:[#allocation8 + $0x218] sm:$0xff] %v1920
    %2140 = vst [vmem:[#allocation8 + $0x220] sm:$0xff] %v1654
    %2141 = vst [vmem:[#allocation8 + $0x228] sm:$0xff] %v1923
    %2142 = vst [vmem:[#allocation8 + $0x230] sm:$0xff] %v1657
    %2143 = vst [vmem:[#allocation8 + $0x238] sm:$0xff] %v1926
    %2144 = vst [vmem:[#allocation8 + $0x240] sm:$0xff] %v1660
    %2145 = vst [vmem:[#allocation8 + $0x248] sm:$0xff] %v1929
    %2146 = vst [vmem:[#allocation8 + $0x250] sm:$0xff] %v1663
    %2147 = vst [vmem:[#allocation8 + $0x258] sm:$0xff] %v1932
    %2148 = vst [vmem:[#allocation8 + $0x260] sm:$0xff] %v1666
    %2149 = vst [vmem:[#allocation8 + $0x268] sm:$0xff] %v1935
    %2150 = vst [vmem:[#allocation8 + $0x270] sm:$0xff] %v1669
    %2151 = vst [vmem:[#allocation8 + $0x278] sm:$0xff] %v1938
    %2152 = vst [vmem:[#allocation8 + $0x280] sm:$0xff] %v1672
    %2153 = vst [vmem:[#allocation8 + $0x288] sm:$0xff] %v1941
    %2154 = vst [vmem:[#allocation8 + $0x290] sm:$0xff] %v1675
    %2155 = vst [vmem:[#allocation8 + $0x298] sm:$0xff] %v1944
    %2156 = vst [vmem:[#allocation8 + $0x2a0] sm:$0xff] %v1678
    %2157 = vst [vmem:[#allocation8 + $0x2a8] sm:$0xff] %v1947
    %2158 = vst [vmem:[#allocation8 + $0x2b0] sm:$0xff] %v1681
    %2159 = vst [vmem:[#allocation8 + $0x2b8] sm:$0xff] %v1950
    %2160 = vst [vmem:[#allocation8 + $0x2c0] sm:$0xff] %v1684
    %2161 = vst [vmem:[#allocation8 + $0x2c8] sm:$0xff] %v1953
    %2162 = vst [vmem:[#allocation8 + $0x2d0] sm:$0xff] %v1687
    %2163 = vst [vmem:[#allocation8 + $0x2d8] sm:$0xff] %v1956
    %2164 = vst [vmem:[#allocation8 + $0x2e0] sm:$0xff] %v1690
    %2165 = vst [vmem:[#allocation8 + $0x2e8] sm:$0xff] %v1959
    %2166 = vst [vmem:[#allocation8 + $0x2f0] sm:$0xff] %v1693
    %2167 = vst [vmem:[#allocation8 + $0x2f8] sm:$0xff] %v1962
    %2168 = vst [vmem:[#allocation8 + $0x300] sm:$0xff] %v1696
    %2169 = vst [vmem:[#allocation8 + $0x308] sm:$0xff] %v1965
    %2170 = vst [vmem:[#allocation8 + $0x310] sm:$0xff] %v1699
    %2171 = vst [vmem:[#allocation8 + $0x318] sm:$0xff] %v1968
    %2172 = vst [vmem:[#allocation8 + $0x320] sm:$0xff] %v1702
    %2173 = vst [vmem:[#allocation8 + $0x328] sm:$0xff] %v1971
    %2174 = vst [vmem:[#allocation8 + $0x330] sm:$0xff] %v1705
    %2175 = vst [vmem:[#allocation8 + $0x338] sm:$0xff] %v1974
    %2176 = vst [vmem:[#allocation8 + $0x340] sm:$0xff] %v1708
    %2177 = vst [vmem:[#allocation8 + $0x348] sm:$0xff] %v1977
    %2178 = vst [vmem:[#allocation8 + $0x350] sm:$0xff] %v1711
    %2179 = vst [vmem:[#allocation8 + $0x358] sm:$0xff] %v1980
    %2180 = vst [vmem:[#allocation8 + $0x360] sm:$0xff] %v1714
    %2181 = vst [vmem:[#allocation8 + $0x368] sm:$0xff] %v1983
    %2182 = vst [vmem:[#allocation8 + $0x370] sm:$0xff] %v1717
    %2183 = vst [vmem:[#allocation8 + $0x378] sm:$0xff] %v1986
    %2184 = vst [vmem:[#allocation8 + $0x380] sm:$0xff] %v1720
    %2185 = vst [vmem:[#allocation8 + $0x388] sm:$0xff] %v1989
    %2186 = vst [vmem:[#allocation8 + $0x390] sm:$0xff] %v1723
    %2187 = vst [vmem:[#allocation8 + $0x398] sm:$0xff] %v1992
    %2188 = vst [vmem:[#allocation8 + $0x3a0] sm:$0xff] %v1726
    %2189 = vst [vmem:[#allocation8 + $0x3a8] sm:$0xff] %v1995
    %2190 = vst [vmem:[#allocation8 + $0x3b0] sm:$0xff] %v1729
    %2191 = vst [vmem:[#allocation8 + $0x3b8] sm:$0xff] %v1998
    %2192 = vst [vmem:[#allocation8 + $0x3c0] sm:$0xff] %v1732
    %2193 = vst [vmem:[#allocation8 + $0x3c8] sm:$0xff] %v2001
    %2194 = vst [vmem:[#allocation8 + $0x3d0] sm:$0xff] %v1735
    %2195 = vst [vmem:[#allocation8 + $0x3d8] sm:$0xff] %v2004
    %2196 = vst [vmem:[#allocation8 + $0x3e0] sm:$0xff] %v1738
    %2197 = vst [vmem:[#allocation8 + $0x3e8] sm:$0xff] %v2007
    %2198 = vst [vmem:[#allocation8 + $0x3f0] sm:$0xff] %v1741
    %2199 = vst [vmem:[#allocation8 + $0x3f8] sm:$0xff] %v2010
    %2200 = vst [vmem:[#allocation8 + $0x400] sm:$0xff] %v1744
    %2201 = vst [vmem:[#allocation8 + $0x408] sm:$0xff] %v2013
    %2202 = vst [vmem:[#allocation8 + $0x410] sm:$0xff] %v1747
    %2203 = vst [vmem:[#allocation8 + $0x418] sm:$0xff] %v2016
    %2204 = vst [vmem:[#allocation8 + $0x420] sm:$0xff] %v1750
    %2205 = vst [vmem:[#allocation8 + $0x428] sm:$0xff] %v2019
    %2206 = vst [vmem:[#allocation8 + $0x430] sm:$0xff] %v1753
    %2207 = vst [vmem:[#allocation8 + $0x438] sm:$0xff] %v2022
    %2208 = vst [vmem:[#allocation8 + $0x440] sm:$0xff] %v1756
    %2209 = vst [vmem:[#allocation8 + $0x448] sm:$0xff] %v2025
    %2210 = vst [vmem:[#allocation8 + $0x450] sm:$0xff] %v1759
    %2211 = vst [vmem:[#allocation8 + $0x458] sm:$0xff] %v2028
    %2212 = vst [vmem:[#allocation8 + $0x460] sm:$0xff] %v1762
    %2213 = vst [vmem:[#allocation8 + $0x468] sm:$0xff] %v2031
    %2214 = vst [vmem:[#allocation8 + $0x470] sm:$0xff] %v1765
    %2215 = vst [vmem:[#allocation8 + $0x478] sm:$0xff] %v2034
    %2216 = vst [vmem:[#allocation8 + $0x480] sm:$0xff] %v1768
    %2217 = vst [vmem:[#allocation8 + $0x488] sm:$0xff] %v2037
    %2218 = vst [vmem:[#allocation8 + $0x490] sm:$0xff] %v1771
    %2219 = vst [vmem:[#allocation8 + $0x498] sm:$0xff] %v2040
    %2220 = vst [vmem:[#allocation8 + $0x4a0] sm:$0xff] %v1774
    %2221 = vst [vmem:[#allocation8 + $0x4a8] sm:$0xff] %v2043
    %2222 = vst [vmem:[#allocation8 + $0x4b0] sm:$0xff] %v1777
    %2223 = vst [vmem:[#allocation8 + $0x4b8] sm:$0xff] %v2046
    %2224 = vst [vmem:[#allocation8 + $0x4c0] sm:$0xff] %v1780
    %2225 = vst [vmem:[#allocation8 + $0x4c8] sm:$0xff] %v2049
    %2226 = vst [vmem:[#allocation8 + $0x4d0] sm:$0xff] %v1783
    %2227 = vst [vmem:[#allocation8 + $0x4d8] sm:$0xff] %v2052
    %2228 = vst [vmem:[#allocation8 + $0x4e0] sm:$0xff] %v1786
    %2229 = vst [vmem:[#allocation8 + $0x4e8] sm:$0xff] %v2055
    %2230 = vst [vmem:[#allocation8 + $0x4f0] sm:$0xff] %v1789
    %2231 = vst [vmem:[#allocation8 + $0x4f8] sm:$0xff] %v2058
    %2232 = vst [vmem:[#allocation8 + $0x500] sm:$0xff] %v1792
    %2233 = vst [vmem:[#allocation8 + $0x508] sm:$0xff] %v2061
    %2234 = vst [vmem:[#allocation8 + $0x510] sm:$0xff] %v1795
    %2235 = vst [vmem:[#allocation8 + $0x518] sm:$0xff] %v2064
    %2236 = vst [vmem:[#allocation8 + $0x520] sm:$0xff] %v1798
    %2237 = vst [vmem:[#allocation8 + $0x528] sm:$0xff] %v2067
    %2238 = vst [vmem:[#allocation8 + $0x530] sm:$0xff] %v1801
    %2239 = vst [vmem:[#allocation8 + $0x538] sm:$0xff] %v2070
    // Predicated region
    $region30: #{tpu_custom_call.1} parent=1 // pred_check
      _
    $region31: #{tpu_custom_call.1} parent=1 // pred_check_branch
      %2241 = sbr.rel (0) target = $region33
    $region32: #{tpu_custom_call.1} parent=1 // pred_region
      %2243 = vsyncadd [#allocation4], 0
      %s2244 = sshll.u32 [#allocation8], 4
      %s2245 = int_to_ptr.vmem [resolvable:$true] %s2244
      %s2246 = sshll.u32 %s4, 4
      %s2247 = int_to_ptr.hbm [resolvable:$true] %s2246
      %2252 = dma.vmem_to_hbm [thread:$0]  %s2245, 21504, %s2247, [#allocation4], 256, 256, 16
    $region33: #{tpu_custom_call.1} parent=1 // pred_fallthru
      _
    // Predicated region
    $region34: #{tpu_custom_call.1} parent=1 // pred_check
      _
    $region35: #{tpu_custom_call.1} parent=1 // pred_check_branch
      %2254 = sbr.rel (0) target = $region37
    $region36: #{tpu_custom_call.1} parent=1 // pred_region
      %2256 = dma.done [#allocation4], 21504
    $region37: #{tpu_custom_call.1} parent=1 // pred_fallthru
      _
    %2257 = vsyncpa [#allocation3], 1
    %2258 = vsyncpa [#allocation6], 1
    %2259 = vsyncpa [#allocation4], 1

</llo_original>
